<compile_context>
chip_gen: v5e
topology: v5e:2x2
jax: 0.10.0
libtpu: 0.0.40
codegen_flags: <defaults>
</compile_context>

<pallas_src>
import jax
import jax.numpy as jnp
from jax import lax
from jax.experimental import pallas as pl
from jax.experimental.pallas import tpu as pltpu

# ----- small config consistent with the module's __init__ -----
VOCAB = 32      # cfg['vocab_size']
HIDDEN = 32     # cfg['hidden_size']
MAXLEN = 8      # cfg['maxlength']
BATCH = 2

# Lane-block order of the packed gates (each block is 2H wide: fwd half then bwd half).
# PyTorch LSTM weight row order is [i, f, g, o]; we place them as [i, f, o, g] so that
# sigmoid covers one contiguous 6H window and tanh one contiguous 2H window.
_GATE_POS = (0, 1, 3, 2)   # pytorch gate index -> lane block index


def _matmul_nt(a, w):
    """a: (M, K), w: (N, K) -> a @ w^T : (M, N)   (PyTorch nn.Linear convention)."""
    return lax.dot_general(a, w, (((1,), (1,)), ((), ())),
                           preferred_element_type=jnp.float32)


def sentence_match_kernel(xw_ref,       # (L, B, 8H) f32: precomputed gate inputs (embed+bias folded)
                          wrec_ref,     # (2H, 8H) bf16 : block-diagonal recurrent weight
                          wlin_ref,     # (H, 2H)  f32  : encoder Linear weight
                          blin_ref,     # (1, H)   f32
                          wfc_ref,      # (2, H)   f32
                          bfc_ref,      # (1, 2)   f32
                          out_ref,      # (B, 2)   f32  : softmax probabilities
                          hstore_ref):  # (L, B, 2H) f32 scratch: carried hidden state per step
    L, B, G = xw_ref.shape
    H = G // 8
    H2 = 2 * H

    # Recurrent weight stays resident in vregs across all L steps (single bf16 MXU pass/step).
    w_rec = wrec_ref[...]

    # ---- fused bidirectional recurrence: lanes [0:H] = fwd state, [H:2H] = bwd state.
    def step(s, carry):
        h, c = carry                                                   # (B, 2H) f32 each
        gates = xw_ref[s] + jnp.dot(h.astype(jnp.bfloat16), w_rec,
                                    preferred_element_type=jnp.float32)  # (B, 8H) f32
        sig = jax.nn.sigmoid(gates[:, 0:6 * H])                        # [ i | f | o ]
        g_g = jnp.tanh(gates[:, 6 * H:8 * H])                          # g
        c = sig[:, H2:2 * H2] * c + sig[:, 0:H2] * g_g                 # (B, 2H)
        h = sig[:, 2 * H2:3 * H2] * jnp.tanh(c)                        # (B, 2H)
        # fwd half is the fwd output at time s; bwd half is the bwd output at time L-1-s.
        hstore_ref[s] = h
        return (h, c)

    h0 = jnp.zeros((B, H2), jnp.float32)
    c0 = jnp.zeros((B, H2), jnp.float32)
    lax.fori_loop(0, L, step, (h0, c0), unroll=True)

    # ---- epilogue (off the serial chain): encoder Linear(2H->H)+ReLU per time step,
    #      averaged over t (AvgPool1d(maxlength)), then fc Linear(H->2) + softmax.
    wlin = wlin_ref[...]                       # (H, 2H)
    wf = wlin[:, 0:H]                          # acts on the forward hidden state
    wb = wlin[:, H:H2]                         # acts on the backward hidden state
    blin = jnp.broadcast_to(blin_ref[...], (B, H))   # hoisted (no per-iter broadcast)

    acc = jnp.zeros((B, H), jnp.float32)
    for t in range(L):                         # static unroll; all indices are constants
        hf_t = hstore_ref[t][:, 0:H]           # fwd hidden at time t
        hb_t = hstore_ref[L - 1 - t][:, H:H2]  # bwd hidden at time t
        acc = acc + jnp.maximum(_matmul_nt(hf_t, wf) + _matmul_nt(hb_t, wb) + blin, 0.0)
    pooled = acc * (1.0 / L)                   # (B, H)

    logits = _matmul_nt(pooled, wfc_ref[...]) + bfc_ref[...]           # (B, 2)
    m = jnp.max(logits, axis=-1, keepdims=True)
    e = jnp.exp(logits - m)
    out_ref[...] = e / jnp.sum(e, axis=-1, keepdims=True)


def init_params(key):
    """Deterministic synthetic parameters with the module's (PyTorch) shapes."""
    H, V = HIDDEN, VOCAB
    ks = jax.random.split(key, 14)
    s = 1.0 / jnp.sqrt(jnp.float32(H))
    u = lambda k, shape: jax.random.uniform(k, shape, jnp.float32, -s, s)

    emb = jax.random.normal(ks[0], (V, H), jnp.float32)
    # nn.Embedding(max_norm=1.0): rows used in forward are renormalized to norm <= 1.
    # TODO(synk): PyTorch renormalizes indexed rows in-forward; here it is applied once at init
    #             (equivalent for frozen-weight inference).
    norm = jnp.sqrt(jnp.sum(emb * emb, axis=1, keepdims=True))
    emb = emb * jnp.where(norm > 1.0, 1.0 / (norm + 1e-7), 1.0)

    return dict(
        emb=emb,
        # forward-direction LSTM weights (PyTorch layout: (4H, in), gate order i,f,g,o)
        wih_f=u(ks[1], (4 * H, H)), whh_f=u(ks[2], (4 * H, H)),
        b_f=(u(ks[3], (4 * H,)) + u(ks[4], (4 * H,))).reshape(1, 4 * H),   # b_ih + b_hh
        # backward-direction LSTM weights
        wih_b=u(ks[5], (4 * H, H)), whh_b=u(ks[6], (4 * H, H)),
        b_b=(u(ks[7], (4 * H,)) + u(ks[8], (4 * H,))).reshape(1, 4 * H),
        # encoder Linear(2H -> H)
        wlin=u(ks[9], (H, 2 * H)), blin=u(ks[10], (H,)).reshape(1, H),
        # fc Linear(H -> 2)
        wfc=u(ks[11], (2, H)), bfc=u(ks[12], (2,)).reshape(1, 2),
    )


def _pack_params(params):
    """Exact algebraic repack of the PyTorch-layout weights for the fused kernel."""
    emb = params['emb']                       # (V, H)
    V, H = emb.shape
    G = 8 * H

    def lane_start(gate, d):                  # gate in pytorch order, d: 0=fwd, 1=bwd
        return _GATE_POS[gate] * 2 * H + d * H

    def make_ih_table(wih, d):                # fold embedding into the input projection
        t = jnp.zeros((V, G), jnp.float32)
        for g in range(4):
            s = lane_start(g, d)
            t = t.at[:, s:s + H].set(emb @ wih[g * H:(g + 1) * H, :].T)
        return t

    t_f = make_ih_table(params['wih_f'], 0)
    t_b = make_ih_table(params['wih_b'], 1)

    w_rec = jnp.zeros((2 * H, G), jnp.float32)   # rows 0:H act on h_f, rows H:2H on h_b
    b_all = jnp.zeros((1, G), jnp.float32)
    for g in range(4):
        sf, sb = lane_start(g, 0), lane_start(g, 1)
        w_rec = w_rec.at[0:H, sf:sf + H].set(params['whh_f'][g * H:(g + 1) * H, :].T)
        w_rec = w_rec.at[H:2 * H, sb:sb + H].set(params['whh_b'][g * H:(g + 1) * H, :].T)
        b_all = b_all.at[0, sf:sf + H].set(params['b_f'][0, g * H:(g + 1) * H])
        b_all = b_all.at[0, sb:sb + H].set(params['b_b'][0, g * H:(g + 1) * H])
    return t_f, t_b, w_rec, b_all


@jax.jit
def sentence_match_forward(x_ids, params):
    # TODO(synk): training branch (CrossEntropyLoss when y is provided) is not implemented;
    #             this is the inference path (softmax probabilities), as in forward(x, y=None).
    B, L = x_ids.shape
    V, H = params['emb'].shape
    G = 8 * H

    t_f, t_b, w_rec, b_all = _pack_params(params)     # tiny glue matmuls outside the kernel
    ids = x_ids.astype(jnp.int32)

    # Embedding + input projection + bias fully hoisted out of the kernel (XLA gather):
    #   xw[t, b, :] = T_f[ids[b, t]] + T_b[ids[b, L-1-t]] + (b_ih + b_hh)
    xw = t_f[ids] + t_b[ids[:, ::-1]] + b_all          # (B, L, 8H)
    xw = jnp.transpose(xw, (1, 0, 2))                  # (L, B, 8H)

    w_rec_bf16 = w_rec.astype(jnp.bfloat16)            # single bf16 MXU pass per recurrence step

    def full(shape):
        nd = len(shape)
        return pl.BlockSpec(shape, lambda i, _nd=nd: (0,) * _nd)

    in_specs = [
        full((L, B, G)),                       # precomputed gate inputs
        full((2 * H, G)),                      # recurrent block-diag weight (bf16)
        full((H, 2 * H)), full((1, H)),        # encoder Linear(2H -> H)
        full((2, H)), full((1, 2)),            # fc Linear(H -> 2)
    ]
    out_specs = pl.BlockSpec((B, 2), lambda i: (0, 0))

    # NOTE: B=2 keeps the whole batch in one program (grid=(1,)); for real batch sizes,
    # tile the batch over a "parallel" grid axis so v7x's second TensorCore is used.
    out = pl.pallas_call(
        sentence_match_kernel,
        out_shape=jax.ShapeDtypeStruct((B, 2), jnp.float32),
        grid_spec=pltpu.PrefetchScalarGridSpec(
            num_scalar_prefetch=0,
            grid=(1,),
            in_specs=in_specs,
            out_specs=out_specs,
            scratch_shapes=[pltpu.VMEM((L, B, 2 * H), jnp.float32)],   # per-step hidden states
        ),
        compiler_params=pltpu.CompilerParams(dimension_semantics=("arbitrary",)),
    )(xw, w_rec_bf16, params['wlin'], params['blin'], params['wfc'], params['bfc'])

    return out


if __name__ == "__main__":
    key = jax.random.PRNGKey(0)
    pkey, xkey = jax.random.split(key)
    params = init_params(pkey)
    x_ids = jax.random.randint(xkey, (BATCH, MAXLEN), 0, VOCAB, dtype=jnp.int32)

    probs = sentence_match_forward(x_ids, params)
    probs = jax.block_until_ready(probs)

    assert probs.shape == (BATCH, 2)
    assert bool(jnp.all(jnp.isfinite(probs)))
    assert bool(jnp.allclose(jnp.sum(probs, axis=-1), 1.0, atol=1e-4))
    print("KERNEL_OK")
</pallas_src>

<mosaic_0001>
module attributes {stable_mosaic.version = 11 : i64} {
  func.func @sentence_match_kernel(%arg0: i32, %arg1: memref<8x2x256xf32, #tpu.memory_space<vmem>>, %arg2: memref<64x256xbf16, #tpu.memory_space<vmem>>, %arg3: memref<32x64xf32, #tpu.memory_space<vmem>>, %arg4: memref<1x32xf32, #tpu.memory_space<vmem>>, %arg5: memref<2x32xf32, #tpu.memory_space<vmem>>, %arg6: memref<1x2xf32, #tpu.memory_space<vmem>>, %arg7: memref<2x2xf32, #tpu.memory_space<vmem>>, %arg8: memref<8x2x64xf32, #tpu.memory_space<vmem>>) attributes {dimension_semantics = [#tpu.dimension_semantics<arbitrary>], iteration_bounds = array<i64: 1>, scalar_prefetch = 0 : i64, scratch_operands = 1 : i64, tpu.core_type = #tpu.core_type<tc>, window_params = [{pipeline_mode = #tpu.pipeline_mode<synchronous>, transform_indices = @transform_0, window_bounds = array<i64: 8, 2, 256>}, {pipeline_mode = #tpu.pipeline_mode<synchronous>, transform_indices = @transform_1, window_bounds = array<i64: 64, 256>}, {pipeline_mode = #tpu.pipeline_mode<synchronous>, transform_indices = @transform_2, window_bounds = array<i64: 32, 64>}, {pipeline_mode = #tpu.pipeline_mode<synchronous>, transform_indices = @transform_3, window_bounds = array<i64: 1, 32>}, {pipeline_mode = #tpu.pipeline_mode<synchronous>, transform_indices = @transform_4, window_bounds = array<i64: 2, 32>}, {pipeline_mode = #tpu.pipeline_mode<synchronous>, transform_indices = @transform_5, window_bounds = array<i64: 1, 2>}, {pipeline_mode = #tpu.pipeline_mode<synchronous>, transform_indices = @transform_6, window_bounds = array<i64: 2, 2>}]} {
    %c0 = arith.constant 0 : index
    %c0_0 = arith.constant 0 : index
    %0 = vector.load %arg2[%c0, %c0_0] : memref<64x256xbf16, #tpu.memory_space<vmem>>, vector<64x256xbf16>
    %cst = arith.constant 0.000000e+00 : f32
    %1 = vector.broadcast %cst : f32 to vector<2x64xf32>
    %cst_1 = arith.constant 0.000000e+00 : f32
    %2 = vector.broadcast %cst_1 : f32 to vector<2x64xf32>
    %c0_i32 = arith.constant 0 : i32
    %3 = arith.index_cast %c0_i32 : i32 to index
    %c0_2 = arith.constant 0 : index
    %c0_3 = arith.constant 0 : index
    %4 = vector.load %arg1[%3, %c0_2, %c0_3] : memref<8x2x256xf32, #tpu.memory_space<vmem>>, vector<1x2x256xf32>
    %5 = vector.shape_cast %4 : vector<1x2x256xf32> to vector<2x256xf32>
    %6 = arith.truncf %1 : vector<2x64xf32> to vector<2x64xbf16>
    %cst_4 = arith.constant dense<0.000000e+00> : vector<2x256xf32>
    %7 = tpu.matmul %6, %0, %cst_4 {dimension_numbers = #tpu.dot_dimension_numbers<[1], [0], [0], [1], [0, 0, 1, 1], [], []>} : vector<2x64xbf16>, vector<64x256xbf16>, vector<2x256xf32> -> vector<2x256xf32>
    %8 = arith.addf %5, %7 : vector<2x256xf32>
    %9 = vector.extract_strided_slice %8 {offsets = [0, 0], sizes = [2, 192], strides = [1, 1]} : vector<2x256xf32> to vector<2x192xf32>
    %10 = arith.negf %9 : vector<2x192xf32>
    %11 = math.exp %10 : vector<2x192xf32>
    %cst_5 = arith.constant 1.000000e+00 : f32
    %12 = vector.broadcast %cst_5 : f32 to vector<2x192xf32>
    %13 = arith.addf %12, %11 : vector<2x192xf32>
    %14 = arith.divf %12, %13 : vector<2x192xf32>
    %15 = vector.extract_strided_slice %8 {offsets = [0, 192], sizes = [2, 64], strides = [1, 1]} : vector<2x256xf32> to vector<2x64xf32>
    %16 = math.tanh %15 : vector<2x64xf32>
    %17 = vector.extract_strided_slice %14 {offsets = [0, 64], sizes = [2, 64], strides = [1, 1]} : vector<2x192xf32> to vector<2x64xf32>
    %18 = arith.mulf %17, %2 : vector<2x64xf32>
    %19 = vector.extract_strided_slice %14 {offsets = [0, 0], sizes = [2, 64], strides = [1, 1]} : vector<2x192xf32> to vector<2x64xf32>
    %20 = arith.mulf %19, %16 : vector<2x64xf32>
    %21 = arith.addf %18, %20 : vector<2x64xf32>
    %22 = vector.extract_strided_slice %14 {offsets = [0, 128], sizes = [2, 64], strides = [1, 1]} : vector<2x192xf32> to vector<2x64xf32>
    %23 = math.tanh %21 : vector<2x64xf32>
    %24 = arith.mulf %22, %23 : vector<2x64xf32>
    %25 = arith.index_cast %c0_i32 : i32 to index
    %c0_6 = arith.constant 0 : index
    %c0_7 = arith.constant 0 : index
    %26 = vector.load %arg8[%25, %c0_6, %c0_7] : memref<8x2x64xf32, #tpu.memory_space<vmem>>, vector<1x2x64xf32>
    %27 = vector.shape_cast %26 : vector<1x2x64xf32> to vector<2x64xf32>
    %28 = vector.shape_cast %24 : vector<2x64xf32> to vector<1x2x64xf32>
    tpu.vector_store %arg8[%25, %c0_6, %c0_7], %28 {strides = array<i32>} : memref<8x2x64xf32, #tpu.memory_space<vmem>>, vector<1x2x64xf32>,
    %c1_i32 = arith.constant 1 : i32
    %29 = arith.index_cast %c1_i32 : i32 to index
    %c0_8 = arith.constant 0 : index
    %c0_9 = arith.constant 0 : index
    %30 = vector.load %arg1[%29, %c0_8, %c0_9] : memref<8x2x256xf32, #tpu.memory_space<vmem>>, vector<1x2x256xf32>
    %31 = vector.shape_cast %30 : vector<1x2x256xf32> to vector<2x256xf32>
    %32 = arith.truncf %24 : vector<2x64xf32> to vector<2x64xbf16>
    %cst_10 = arith.constant dense<0.000000e+00> : vector<2x256xf32>
    %33 = tpu.matmul %32, %0, %cst_10 {dimension_numbers = #tpu.dot_dimension_numbers<[1], [0], [0], [1], [0, 0, 1, 1], [], []>} : vector<2x64xbf16>, vector<64x256xbf16>, vector<2x256xf32> -> vector<2x256xf32>
    %34 = arith.addf %31, %33 : vector<2x256xf32>
    %35 = vector.extract_strided_slice %34 {offsets = [0, 0], sizes = [2, 192], strides = [1, 1]} : vector<2x256xf32> to vector<2x192xf32>
    %36 = arith.negf %35 : vector<2x192xf32>
    %37 = math.exp %36 : vector<2x192xf32>
    %cst_11 = arith.constant 1.000000e+00 : f32
    %38 = vector.broadcast %cst_11 : f32 to vector<2x192xf32>
    %39 = arith.addf %38, %37 : vector<2x192xf32>
    %40 = arith.divf %38, %39 : vector<2x192xf32>
    %41 = vector.extract_strided_slice %34 {offsets = [0, 192], sizes = [2, 64], strides = [1, 1]} : vector<2x256xf32> to vector<2x64xf32>
    %42 = math.tanh %41 : vector<2x64xf32>
    %43 = vector.extract_strided_slice %40 {offsets = [0, 64], sizes = [2, 64], strides = [1, 1]} : vector<2x192xf32> to vector<2x64xf32>
    %44 = arith.mulf %43, %21 : vector<2x64xf32>
    %45 = vector.extract_strided_slice %40 {offsets = [0, 0], sizes = [2, 64], strides = [1, 1]} : vector<2x192xf32> to vector<2x64xf32>
    %46 = arith.mulf %45, %42 : vector<2x64xf32>
    %47 = arith.addf %44, %46 : vector<2x64xf32>
    %48 = vector.extract_strided_slice %40 {offsets = [0, 128], sizes = [2, 64], strides = [1, 1]} : vector<2x192xf32> to vector<2x64xf32>
    %49 = math.tanh %47 : vector<2x64xf32>
    %50 = arith.mulf %48, %49 : vector<2x64xf32>
    %51 = arith.index_cast %c1_i32 : i32 to index
    %c0_12 = arith.constant 0 : index
    %c0_13 = arith.constant 0 : index
    %52 = vector.load %arg8[%51, %c0_12, %c0_13] : memref<8x2x64xf32, #tpu.memory_space<vmem>>, vector<1x2x64xf32>
    %53 = vector.shape_cast %52 : vector<1x2x64xf32> to vector<2x64xf32>
    %54 = vector.shape_cast %50 : vector<2x64xf32> to vector<1x2x64xf32>
    tpu.vector_store %arg8[%51, %c0_12, %c0_13], %54 {strides = array<i32>} : memref<8x2x64xf32, #tpu.memory_space<vmem>>, vector<1x2x64xf32>,
    %c2_i32 = arith.constant 2 : i32
    %55 = arith.index_cast %c2_i32 : i32 to index
    %c0_14 = arith.constant 0 : index
    %c0_15 = arith.constant 0 : index
    %56 = vector.load %arg1[%55, %c0_14, %c0_15] : memref<8x2x256xf32, #tpu.memory_space<vmem>>, vector<1x2x256xf32>
    %57 = vector.shape_cast %56 : vector<1x2x256xf32> to vector<2x256xf32>
    %58 = arith.truncf %50 : vector<2x64xf32> to vector<2x64xbf16>
    %cst_16 = arith.constant dense<0.000000e+00> : vector<2x256xf32>
    %59 = tpu.matmul %58, %0, %cst_16 {dimension_numbers = #tpu.dot_dimension_numbers<[1], [0], [0], [1], [0, 0, 1, 1], [], []>} : vector<2x64xbf16>, vector<64x256xbf16>, vector<2x256xf32> -> vector<2x256xf32>
    %60 = arith.addf %57, %59 : vector<2x256xf32>
    %61 = vector.extract_strided_slice %60 {offsets = [0, 0], sizes = [2, 192], strides = [1, 1]} : vector<2x256xf32> to vector<2x192xf32>
    %62 = arith.negf %61 : vector<2x192xf32>
    %63 = math.exp %62 : vector<2x192xf32>
    %cst_17 = arith.constant 1.000000e+00 : f32
    %64 = vector.broadcast %cst_17 : f32 to vector<2x192xf32>
    %65 = arith.addf %64, %63 : vector<2x192xf32>
    %66 = arith.divf %64, %65 : vector<2x192xf32>
    %67 = vector.extract_strided_slice %60 {offsets = [0, 192], sizes = [2, 64], strides = [1, 1]} : vector<2x256xf32> to vector<2x64xf32>
    %68 = math.tanh %67 : vector<2x64xf32>
    %69 = vector.extract_strided_slice %66 {offsets = [0, 64], sizes = [2, 64], strides = [1, 1]} : vector<2x192xf32> to vector<2x64xf32>
    %70 = arith.mulf %69, %47 : vector<2x64xf32>
    %71 = vector.extract_strided_slice %66 {offsets = [0, 0], sizes = [2, 64], strides = [1, 1]} : vector<2x192xf32> to vector<2x64xf32>
    %72 = arith.mulf %71, %68 : vector<2x64xf32>
    %73 = arith.addf %70, %72 : vector<2x64xf32>
    %74 = vector.extract_strided_slice %66 {offsets = [0, 128], sizes = [2, 64], strides = [1, 1]} : vector<2x192xf32> to vector<2x64xf32>
    %75 = math.tanh %73 : vector<2x64xf32>
    %76 = arith.mulf %74, %75 : vector<2x64xf32>
    %77 = arith.index_cast %c2_i32 : i32 to index
    %c0_18 = arith.constant 0 : index
    %c0_19 = arith.constant 0 : index
    %78 = vector.load %arg8[%77, %c0_18, %c0_19] : memref<8x2x64xf32, #tpu.memory_space<vmem>>, vector<1x2x64xf32>
    %79 = vector.shape_cast %78 : vector<1x2x64xf32> to vector<2x64xf32>
    %80 = vector.shape_cast %76 : vector<2x64xf32> to vector<1x2x64xf32>
    tpu.vector_store %arg8[%77, %c0_18, %c0_19], %80 {strides = array<i32>} : memref<8x2x64xf32, #tpu.memory_space<vmem>>, vector<1x2x64xf32>,
    %c3_i32 = arith.constant 3 : i32
    %81 = arith.index_cast %c3_i32 : i32 to index
    %c0_20 = arith.constant 0 : index
    %c0_21 = arith.constant 0 : index
    %82 = vector.load %arg1[%81, %c0_20, %c0_21] : memref<8x2x256xf32, #tpu.memory_space<vmem>>, vector<1x2x256xf32>
    %83 = vector.shape_cast %82 : vector<1x2x256xf32> to vector<2x256xf32>
    %84 = arith.truncf %76 : vector<2x64xf32> to vector<2x64xbf16>
    %cst_22 = arith.constant dense<0.000000e+00> : vector<2x256xf32>
    %85 = tpu.matmul %84, %0, %cst_22 {dimension_numbers = #tpu.dot_dimension_numbers<[1], [0], [0], [1], [0, 0, 1, 1], [], []>} : vector<2x64xbf16>, vector<64x256xbf16>, vector<2x256xf32> -> vector<2x256xf32>
    %86 = arith.addf %83, %85 : vector<2x256xf32>
    %87 = vector.extract_strided_slice %86 {offsets = [0, 0], sizes = [2, 192], strides = [1, 1]} : vector<2x256xf32> to vector<2x192xf32>
    %88 = arith.negf %87 : vector<2x192xf32>
    %89 = math.exp %88 : vector<2x192xf32>
    %cst_23 = arith.constant 1.000000e+00 : f32
    %90 = vector.broadcast %cst_23 : f32 to vector<2x192xf32>
    %91 = arith.addf %90, %89 : vector<2x192xf32>
    %92 = arith.divf %90, %91 : vector<2x192xf32>
    %93 = vector.extract_strided_slice %86 {offsets = [0, 192], sizes = [2, 64], strides = [1, 1]} : vector<2x256xf32> to vector<2x64xf32>
    %94 = math.tanh %93 : vector<2x64xf32>
    %95 = vector.extract_strided_slice %92 {offsets = [0, 64], sizes = [2, 64], strides = [1, 1]} : vector<2x192xf32> to vector<2x64xf32>
    %96 = arith.mulf %95, %73 : vector<2x64xf32>
    %97 = vector.extract_strided_slice %92 {offsets = [0, 0], sizes = [2, 64], strides = [1, 1]} : vector<2x192xf32> to vector<2x64xf32>
    %98 = arith.mulf %97, %94 : vector<2x64xf32>
    %99 = arith.addf %96, %98 : vector<2x64xf32>
    %100 = vector.extract_strided_slice %92 {offsets = [0, 128], sizes = [2, 64], strides = [1, 1]} : vector<2x192xf32> to vector<2x64xf32>
    %101 = math.tanh %99 : vector<2x64xf32>
    %102 = arith.mulf %100, %101 : vector<2x64xf32>
    %103 = arith.index_cast %c3_i32 : i32 to index
    %c0_24 = arith.constant 0 : index
    %c0_25 = arith.constant 0 : index
    %104 = vector.load %arg8[%103, %c0_24, %c0_25] : memref<8x2x64xf32, #tpu.memory_space<vmem>>, vector<1x2x64xf32>
    %105 = vector.shape_cast %104 : vector<1x2x64xf32> to vector<2x64xf32>
    %106 = vector.shape_cast %102 : vector<2x64xf32> to vector<1x2x64xf32>
    tpu.vector_store %arg8[%103, %c0_24, %c0_25], %106 {strides = array<i32>} : memref<8x2x64xf32, #tpu.memory_space<vmem>>, vector<1x2x64xf32>,
    %c4_i32 = arith.constant 4 : i32
    %107 = arith.index_cast %c4_i32 : i32 to index
    %c0_26 = arith.constant 0 : index
    %c0_27 = arith.constant 0 : index
    %108 = vector.load %arg1[%107, %c0_26, %c0_27] : memref<8x2x256xf32, #tpu.memory_space<vmem>>, vector<1x2x256xf32>
    %109 = vector.shape_cast %108 : vector<1x2x256xf32> to vector<2x256xf32>
    %110 = arith.truncf %102 : vector<2x64xf32> to vector<2x64xbf16>
    %cst_28 = arith.constant dense<0.000000e+00> : vector<2x256xf32>
    %111 = tpu.matmul %110, %0, %cst_28 {dimension_numbers = #tpu.dot_dimension_numbers<[1], [0], [0], [1], [0, 0, 1, 1], [], []>} : vector<2x64xbf16>, vector<64x256xbf16>, vector<2x256xf32> -> vector<2x256xf32>
    %112 = arith.addf %109, %111 : vector<2x256xf32>
    %113 = vector.extract_strided_slice %112 {offsets = [0, 0], sizes = [2, 192], strides = [1, 1]} : vector<2x256xf32> to vector<2x192xf32>
    %114 = arith.negf %113 : vector<2x192xf32>
    %115 = math.exp %114 : vector<2x192xf32>
    %cst_29 = arith.constant 1.000000e+00 : f32
    %116 = vector.broadcast %cst_29 : f32 to vector<2x192xf32>
    %117 = arith.addf %116, %115 : vector<2x192xf32>
    %118 = arith.divf %116, %117 : vector<2x192xf32>
    %119 = vector.extract_strided_slice %112 {offsets = [0, 192], sizes = [2, 64], strides = [1, 1]} : vector<2x256xf32> to vector<2x64xf32>
    %120 = math.tanh %119 : vector<2x64xf32>
    %121 = vector.extract_strided_slice %118 {offsets = [0, 64], sizes = [2, 64], strides = [1, 1]} : vector<2x192xf32> to vector<2x64xf32>
    %122 = arith.mulf %121, %99 : vector<2x64xf32>
    %123 = vector.extract_strided_slice %118 {offsets = [0, 0], sizes = [2, 64], strides = [1, 1]} : vector<2x192xf32> to vector<2x64xf32>
    %124 = arith.mulf %123, %120 : vector<2x64xf32>
    %125 = arith.addf %122, %124 : vector<2x64xf32>
    %126 = vector.extract_strided_slice %118 {offsets = [0, 128], sizes = [2, 64], strides = [1, 1]} : vector<2x192xf32> to vector<2x64xf32>
    %127 = math.tanh %125 : vector<2x64xf32>
    %128 = arith.mulf %126, %127 : vector<2x64xf32>
    %129 = arith.index_cast %c4_i32 : i32 to index
    %c0_30 = arith.constant 0 : index
    %c0_31 = arith.constant 0 : index
    %130 = vector.load %arg8[%129, %c0_30, %c0_31] : memref<8x2x64xf32, #tpu.memory_space<vmem>>, vector<1x2x64xf32>
    %131 = vector.shape_cast %130 : vector<1x2x64xf32> to vector<2x64xf32>
    %132 = vector.shape_cast %128 : vector<2x64xf32> to vector<1x2x64xf32>
    tpu.vector_store %arg8[%129, %c0_30, %c0_31], %132 {strides = array<i32>} : memref<8x2x64xf32, #tpu.memory_space<vmem>>, vector<1x2x64xf32>,
    %c5_i32 = arith.constant 5 : i32
    %133 = arith.index_cast %c5_i32 : i32 to index
    %c0_32 = arith.constant 0 : index
    %c0_33 = arith.constant 0 : index
    %134 = vector.load %arg1[%133, %c0_32, %c0_33] : memref<8x2x256xf32, #tpu.memory_space<vmem>>, vector<1x2x256xf32>
    %135 = vector.shape_cast %134 : vector<1x2x256xf32> to vector<2x256xf32>
    %136 = arith.truncf %128 : vector<2x64xf32> to vector<2x64xbf16>
    %cst_34 = arith.constant dense<0.000000e+00> : vector<2x256xf32>
    %137 = tpu.matmul %136, %0, %cst_34 {dimension_numbers = #tpu.dot_dimension_numbers<[1], [0], [0], [1], [0, 0, 1, 1], [], []>} : vector<2x64xbf16>, vector<64x256xbf16>, vector<2x256xf32> -> vector<2x256xf32>
    %138 = arith.addf %135, %137 : vector<2x256xf32>
    %139 = vector.extract_strided_slice %138 {offsets = [0, 0], sizes = [2, 192], strides = [1, 1]} : vector<2x256xf32> to vector<2x192xf32>
    %140 = arith.negf %139 : vector<2x192xf32>
    %141 = math.exp %140 : vector<2x192xf32>
    %cst_35 = arith.constant 1.000000e+00 : f32
    %142 = vector.broadcast %cst_35 : f32 to vector<2x192xf32>
    %143 = arith.addf %142, %141 : vector<2x192xf32>
    %144 = arith.divf %142, %143 : vector<2x192xf32>
    %145 = vector.extract_strided_slice %138 {offsets = [0, 192], sizes = [2, 64], strides = [1, 1]} : vector<2x256xf32> to vector<2x64xf32>
    %146 = math.tanh %145 : vector<2x64xf32>
    %147 = vector.extract_strided_slice %144 {offsets = [0, 64], sizes = [2, 64], strides = [1, 1]} : vector<2x192xf32> to vector<2x64xf32>
    %148 = arith.mulf %147, %125 : vector<2x64xf32>
    %149 = vector.extract_strided_slice %144 {offsets = [0, 0], sizes = [2, 64], strides = [1, 1]} : vector<2x192xf32> to vector<2x64xf32>
    %150 = arith.mulf %149, %146 : vector<2x64xf32>
    %151 = arith.addf %148, %150 : vector<2x64xf32>
    %152 = vector.extract_strided_slice %144 {offsets = [0, 128], sizes = [2, 64], strides = [1, 1]} : vector<2x192xf32> to vector<2x64xf32>
    %153 = math.tanh %151 : vector<2x64xf32>
    %154 = arith.mulf %152, %153 : vector<2x64xf32>
    %155 = arith.index_cast %c5_i32 : i32 to index
    %c0_36 = arith.constant 0 : index
    %c0_37 = arith.constant 0 : index
    %156 = vector.load %arg8[%155, %c0_36, %c0_37] : memref<8x2x64xf32, #tpu.memory_space<vmem>>, vector<1x2x64xf32>
    %157 = vector.shape_cast %156 : vector<1x2x64xf32> to vector<2x64xf32>
    %158 = vector.shape_cast %154 : vector<2x64xf32> to vector<1x2x64xf32>
    tpu.vector_store %arg8[%155, %c0_36, %c0_37], %158 {strides = array<i32>} : memref<8x2x64xf32, #tpu.memory_space<vmem>>, vector<1x2x64xf32>,
    %c6_i32 = arith.constant 6 : i32
    %159 = arith.index_cast %c6_i32 : i32 to index
    %c0_38 = arith.constant 0 : index
    %c0_39 = arith.constant 0 : index
    %160 = vector.load %arg1[%159, %c0_38, %c0_39] : memref<8x2x256xf32, #tpu.memory_space<vmem>>, vector<1x2x256xf32>
    %161 = vector.shape_cast %160 : vector<1x2x256xf32> to vector<2x256xf32>
    %162 = arith.truncf %154 : vector<2x64xf32> to vector<2x64xbf16>
    %cst_40 = arith.constant dense<0.000000e+00> : vector<2x256xf32>
    %163 = tpu.matmul %162, %0, %cst_40 {dimension_numbers = #tpu.dot_dimension_numbers<[1], [0], [0], [1], [0, 0, 1, 1], [], []>} : vector<2x64xbf16>, vector<64x256xbf16>, vector<2x256xf32> -> vector<2x256xf32>
    %164 = arith.addf %161, %163 : vector<2x256xf32>
    %165 = vector.extract_strided_slice %164 {offsets = [0, 0], sizes = [2, 192], strides = [1, 1]} : vector<2x256xf32> to vector<2x192xf32>
    %166 = arith.negf %165 : vector<2x192xf32>
    %167 = math.exp %166 : vector<2x192xf32>
    %cst_41 = arith.constant 1.000000e+00 : f32
    %168 = vector.broadcast %cst_41 : f32 to vector<2x192xf32>
    %169 = arith.addf %168, %167 : vector<2x192xf32>
    %170 = arith.divf %168, %169 : vector<2x192xf32>
    %171 = vector.extract_strided_slice %164 {offsets = [0, 192], sizes = [2, 64], strides = [1, 1]} : vector<2x256xf32> to vector<2x64xf32>
    %172 = math.tanh %171 : vector<2x64xf32>
    %173 = vector.extract_strided_slice %170 {offsets = [0, 64], sizes = [2, 64], strides = [1, 1]} : vector<2x192xf32> to vector<2x64xf32>
    %174 = arith.mulf %173, %151 : vector<2x64xf32>
    %175 = vector.extract_strided_slice %170 {offsets = [0, 0], sizes = [2, 64], strides = [1, 1]} : vector<2x192xf32> to vector<2x64xf32>
    %176 = arith.mulf %175, %172 : vector<2x64xf32>
    %177 = arith.addf %174, %176 : vector<2x64xf32>
    %178 = vector.extract_strided_slice %170 {offsets = [0, 128], sizes = [2, 64], strides = [1, 1]} : vector<2x192xf32> to vector<2x64xf32>
    %179 = math.tanh %177 : vector<2x64xf32>
    %180 = arith.mulf %178, %179 : vector<2x64xf32>
    %181 = arith.index_cast %c6_i32 : i32 to index
    %c0_42 = arith.constant 0 : index
    %c0_43 = arith.constant 0 : index
    %182 = vector.load %arg8[%181, %c0_42, %c0_43] : memref<8x2x64xf32, #tpu.memory_space<vmem>>, vector<1x2x64xf32>
    %183 = vector.shape_cast %182 : vector<1x2x64xf32> to vector<2x64xf32>
    %184 = vector.shape_cast %180 : vector<2x64xf32> to vector<1x2x64xf32>
    tpu.vector_store %arg8[%181, %c0_42, %c0_43], %184 {strides = array<i32>} : memref<8x2x64xf32, #tpu.memory_space<vmem>>, vector<1x2x64xf32>,
    %c7_i32 = arith.constant 7 : i32
    %185 = arith.index_cast %c7_i32 : i32 to index
    %c0_44 = arith.constant 0 : index
    %c0_45 = arith.constant 0 : index
    %186 = vector.load %arg1[%185, %c0_44, %c0_45] : memref<8x2x256xf32, #tpu.memory_space<vmem>>, vector<1x2x256xf32>
    %187 = vector.shape_cast %186 : vector<1x2x256xf32> to vector<2x256xf32>
    %188 = arith.truncf %180 : vector<2x64xf32> to vector<2x64xbf16>
    %cst_46 = arith.constant dense<0.000000e+00> : vector<2x256xf32>
    %189 = tpu.matmul %188, %0, %cst_46 {dimension_numbers = #tpu.dot_dimension_numbers<[1], [0], [0], [1], [0, 0, 1, 1], [], []>} : vector<2x64xbf16>, vector<64x256xbf16>, vector<2x256xf32> -> vector<2x256xf32>
    %190 = arith.addf %187, %189 : vector<2x256xf32>
    %191 = vector.extract_strided_slice %190 {offsets = [0, 0], sizes = [2, 192], strides = [1, 1]} : vector<2x256xf32> to vector<2x192xf32>
    %192 = arith.negf %191 : vector<2x192xf32>
    %193 = math.exp %192 : vector<2x192xf32>
    %cst_47 = arith.constant 1.000000e+00 : f32
    %194 = vector.broadcast %cst_47 : f32 to vector<2x192xf32>
    %195 = arith.addf %194, %193 : vector<2x192xf32>
    %196 = arith.divf %194, %195 : vector<2x192xf32>
    %197 = vector.extract_strided_slice %190 {offsets = [0, 192], sizes = [2, 64], strides = [1, 1]} : vector<2x256xf32> to vector<2x64xf32>
    %198 = math.tanh %197 : vector<2x64xf32>
    %199 = vector.extract_strided_slice %196 {offsets = [0, 64], sizes = [2, 64], strides = [1, 1]} : vector<2x192xf32> to vector<2x64xf32>
    %200 = arith.mulf %199, %177 : vector<2x64xf32>
    %201 = vector.extract_strided_slice %196 {offsets = [0, 0], sizes = [2, 64], strides = [1, 1]} : vector<2x192xf32> to vector<2x64xf32>
    %202 = arith.mulf %201, %198 : vector<2x64xf32>
    %203 = arith.addf %200, %202 : vector<2x64xf32>
    %204 = vector.extract_strided_slice %196 {offsets = [0, 128], sizes = [2, 64], strides = [1, 1]} : vector<2x192xf32> to vector<2x64xf32>
    %205 = math.tanh %203 : vector<2x64xf32>
    %206 = arith.mulf %204, %205 : vector<2x64xf32>
    %207 = arith.index_cast %c7_i32 : i32 to index
    %c0_48 = arith.constant 0 : index
    %c0_49 = arith.constant 0 : index
    %208 = vector.load %arg8[%207, %c0_48, %c0_49] : memref<8x2x64xf32, #tpu.memory_space<vmem>>, vector<1x2x64xf32>
    %209 = vector.shape_cast %208 : vector<1x2x64xf32> to vector<2x64xf32>
    %210 = vector.shape_cast %206 : vector<2x64xf32> to vector<1x2x64xf32>
    tpu.vector_store %arg8[%207, %c0_48, %c0_49], %210 {strides = array<i32>} : memref<8x2x64xf32, #tpu.memory_space<vmem>>, vector<1x2x64xf32>,
    %c8_i32 = arith.constant 8 : i32
    %c0_50 = arith.constant 0 : index
    %c0_51 = arith.constant 0 : index
    %211 = vector.load %arg3[%c0_50, %c0_51] : memref<32x64xf32, #tpu.memory_space<vmem>>, vector<32x64xf32>
    %212 = vector.extract_strided_slice %211 {offsets = [0, 0], sizes = [32, 32], strides = [1, 1]} : vector<32x64xf32> to vector<32x32xf32>
    %213 = vector.extract_strided_slice %211 {offsets = [0, 32], sizes = [32, 32], strides = [1, 1]} : vector<32x64xf32> to vector<32x32xf32>
    %c0_52 = arith.constant 0 : index
    %c0_53 = arith.constant 0 : index
    %214 = vector.load %arg4[%c0_52, %c0_53] : memref<1x32xf32, #tpu.memory_space<vmem>>, vector<1x32xf32>
    %215 = vector.shape_cast %214 : vector<1x32xf32> to vector<1x32xf32>
    %216 = vector.broadcast %215 : vector<1x32xf32> to vector<2x32xf32>
    %cst_54 = arith.constant 0.000000e+00 : f32
    %217 = vector.broadcast %cst_54 : f32 to vector<2x32xf32>
    %c0_55 = arith.constant 0 : index
    %c0_56 = arith.constant 0 : index
    %c0_57 = arith.constant 0 : index
    %218 = vector.load %arg8[%c0_55, %c0_56, %c0_57] : memref<8x2x64xf32, #tpu.memory_space<vmem>>, vector<1x2x64xf32>
    %219 = vector.shape_cast %218 : vector<1x2x64xf32> to vector<2x64xf32>
    %220 = vector.extract_strided_slice %219 {offsets = [0, 0], sizes = [2, 32], strides = [1, 1]} : vector<2x64xf32> to vector<2x32xf32>
    %c7 = arith.constant 7 : index
    %c0_58 = arith.constant 0 : index
    %c0_59 = arith.constant 0 : index
    %221 = vector.load %arg8[%c7, %c0_58, %c0_59] : memref<8x2x64xf32, #tpu.memory_space<vmem>>, vector<1x2x64xf32>
    %222 = vector.shape_cast %221 : vector<1x2x64xf32> to vector<2x64xf32>
    %223 = vector.extract_strided_slice %222 {offsets = [0, 32], sizes = [2, 32], strides = [1, 1]} : vector<2x64xf32> to vector<2x32xf32>
    %cst_60 = arith.constant dense<0.000000e+00> : vector<2x32xf32>
    %224 = tpu.matmul %220, %212, %cst_60 {dimension_numbers = #tpu.dot_dimension_numbers<[1], [1], [0], [0], [0, 0, 1, 0], [], []>} : vector<2x32xf32>, vector<32x32xf32>, vector<2x32xf32> -> vector<2x32xf32>
    %cst_61 = arith.constant dense<0.000000e+00> : vector<2x32xf32>
    %225 = tpu.matmul %223, %213, %cst_61 {dimension_numbers = #tpu.dot_dimension_numbers<[1], [1], [0], [0], [0, 0, 1, 0], [], []>} : vector<2x32xf32>, vector<32x32xf32>, vector<2x32xf32> -> vector<2x32xf32>
    %226 = arith.addf %224, %225 : vector<2x32xf32>
    %227 = arith.addf %226, %216 : vector<2x32xf32>
    %cst_62 = arith.constant 0.000000e+00 : f32
    %228 = vector.broadcast %cst_62 : f32 to vector<2x32xf32>
    %229 = arith.maximumf %227, %228 : vector<2x32xf32>
    %230 = arith.addf %217, %229 : vector<2x32xf32>
    %c1 = arith.constant 1 : index
    %c0_63 = arith.constant 0 : index
    %c0_64 = arith.constant 0 : index
    %231 = vector.load %arg8[%c1, %c0_63, %c0_64] : memref<8x2x64xf32, #tpu.memory_space<vmem>>, vector<1x2x64xf32>
    %232 = vector.shape_cast %231 : vector<1x2x64xf32> to vector<2x64xf32>
    %233 = vector.extract_strided_slice %232 {offsets = [0, 0], sizes = [2, 32], strides = [1, 1]} : vector<2x64xf32> to vector<2x32xf32>
    %c6 = arith.constant 6 : index
    %c0_65 = arith.constant 0 : index
    %c0_66 = arith.constant 0 : index
    %234 = vector.load %arg8[%c6, %c0_65, %c0_66] : memref<8x2x64xf32, #tpu.memory_space<vmem>>, vector<1x2x64xf32>
    %235 = vector.shape_cast %234 : vector<1x2x64xf32> to vector<2x64xf32>
    %236 = vector.extract_strided_slice %235 {offsets = [0, 32], sizes = [2, 32], strides = [1, 1]} : vector<2x64xf32> to vector<2x32xf32>
    %cst_67 = arith.constant dense<0.000000e+00> : vector<2x32xf32>
    %237 = tpu.matmul %233, %212, %cst_67 {dimension_numbers = #tpu.dot_dimension_numbers<[1], [1], [0], [0], [0, 0, 1, 0], [], []>} : vector<2x32xf32>, vector<32x32xf32>, vector<2x32xf32> -> vector<2x32xf32>
    %cst_68 = arith.constant dense<0.000000e+00> : vector<2x32xf32>
    %238 = tpu.matmul %236, %213, %cst_68 {dimension_numbers = #tpu.dot_dimension_numbers<[1], [1], [0], [0], [0, 0, 1, 0], [], []>} : vector<2x32xf32>, vector<32x32xf32>, vector<2x32xf32> -> vector<2x32xf32>
    %239 = arith.addf %237, %238 : vector<2x32xf32>
    %240 = arith.addf %239, %216 : vector<2x32xf32>
    %cst_69 = arith.constant 0.000000e+00 : f32
    %241 = vector.broadcast %cst_69 : f32 to vector<2x32xf32>
    %242 = arith.maximumf %240, %241 : vector<2x32xf32>
    %243 = arith.addf %230, %242 : vector<2x32xf32>
    %c2 = arith.constant 2 : index
    %c0_70 = arith.constant 0 : index
    %c0_71 = arith.constant 0 : index
    %244 = vector.load %arg8[%c2, %c0_70, %c0_71] : memref<8x2x64xf32, #tpu.memory_space<vmem>>, vector<1x2x64xf32>
    %245 = vector.shape_cast %244 : vector<1x2x64xf32> to vector<2x64xf32>
    %246 = vector.extract_strided_slice %245 {offsets = [0, 0], sizes = [2, 32], strides = [1, 1]} : vector<2x64xf32> to vector<2x32xf32>
    %c5 = arith.constant 5 : index
    %c0_72 = arith.constant 0 : index
    %c0_73 = arith.constant 0 : index
    %247 = vector.load %arg8[%c5, %c0_72, %c0_73] : memref<8x2x64xf32, #tpu.memory_space<vmem>>, vector<1x2x64xf32>
    %248 = vector.shape_cast %247 : vector<1x2x64xf32> to vector<2x64xf32>
    %249 = vector.extract_strided_slice %248 {offsets = [0, 32], sizes = [2, 32], strides = [1, 1]} : vector<2x64xf32> to vector<2x32xf32>
    %cst_74 = arith.constant dense<0.000000e+00> : vector<2x32xf32>
    %250 = tpu.matmul %246, %212, %cst_74 {dimension_numbers = #tpu.dot_dimension_numbers<[1], [1], [0], [0], [0, 0, 1, 0], [], []>} : vector<2x32xf32>, vector<32x32xf32>, vector<2x32xf32> -> vector<2x32xf32>
    %cst_75 = arith.constant dense<0.000000e+00> : vector<2x32xf32>
    %251 = tpu.matmul %249, %213, %cst_75 {dimension_numbers = #tpu.dot_dimension_numbers<[1], [1], [0], [0], [0, 0, 1, 0], [], []>} : vector<2x32xf32>, vector<32x32xf32>, vector<2x32xf32> -> vector<2x32xf32>
    %252 = arith.addf %250, %251 : vector<2x32xf32>
    %253 = arith.addf %252, %216 : vector<2x32xf32>
    %cst_76 = arith.constant 0.000000e+00 : f32
    %254 = vector.broadcast %cst_76 : f32 to vector<2x32xf32>
    %255 = arith.maximumf %253, %254 : vector<2x32xf32>
    %256 = arith.addf %243, %255 : vector<2x32xf32>
    %c3 = arith.constant 3 : index
    %c0_77 = arith.constant 0 : index
    %c0_78 = arith.constant 0 : index
    %257 = vector.load %arg8[%c3, %c0_77, %c0_78] : memref<8x2x64xf32, #tpu.memory_space<vmem>>, vector<1x2x64xf32>
    %258 = vector.shape_cast %257 : vector<1x2x64xf32> to vector<2x64xf32>
    %259 = vector.extract_strided_slice %258 {offsets = [0, 0], sizes = [2, 32], strides = [1, 1]} : vector<2x64xf32> to vector<2x32xf32>
    %c4 = arith.constant 4 : index
    %c0_79 = arith.constant 0 : index
    %c0_80 = arith.constant 0 : index
    %260 = vector.load %arg8[%c4, %c0_79, %c0_80] : memref<8x2x64xf32, #tpu.memory_space<vmem>>, vector<1x2x64xf32>
    %261 = vector.shape_cast %260 : vector<1x2x64xf32> to vector<2x64xf32>
    %262 = vector.extract_strided_slice %261 {offsets = [0, 32], sizes = [2, 32], strides = [1, 1]} : vector<2x64xf32> to vector<2x32xf32>
    %cst_81 = arith.constant dense<0.000000e+00> : vector<2x32xf32>
    %263 = tpu.matmul %259, %212, %cst_81 {dimension_numbers = #tpu.dot_dimension_numbers<[1], [1], [0], [0], [0, 0, 1, 0], [], []>} : vector<2x32xf32>, vector<32x32xf32>, vector<2x32xf32> -> vector<2x32xf32>
    %cst_82 = arith.constant dense<0.000000e+00> : vector<2x32xf32>
    %264 = tpu.matmul %262, %213, %cst_82 {dimension_numbers = #tpu.dot_dimension_numbers<[1], [1], [0], [0], [0, 0, 1, 0], [], []>} : vector<2x32xf32>, vector<32x32xf32>, vector<2x32xf32> -> vector<2x32xf32>
    %265 = arith.addf %263, %264 : vector<2x32xf32>
    %266 = arith.addf %265, %216 : vector<2x32xf32>
    %cst_83 = arith.constant 0.000000e+00 : f32
    %267 = vector.broadcast %cst_83 : f32 to vector<2x32xf32>
    %268 = arith.maximumf %266, %267 : vector<2x32xf32>
    %269 = arith.addf %256, %268 : vector<2x32xf32>
    %c4_84 = arith.constant 4 : index
    %c0_85 = arith.constant 0 : index
    %c0_86 = arith.constant 0 : index
    %270 = vector.load %arg8[%c4_84, %c0_85, %c0_86] : memref<8x2x64xf32, #tpu.memory_space<vmem>>, vector<1x2x64xf32>
    %271 = vector.shape_cast %270 : vector<1x2x64xf32> to vector<2x64xf32>
    %272 = vector.extract_strided_slice %271 {offsets = [0, 0], sizes = [2, 32], strides = [1, 1]} : vector<2x64xf32> to vector<2x32xf32>
    %c3_87 = arith.constant 3 : index
    %c0_88 = arith.constant 0 : index
    %c0_89 = arith.constant 0 : index
    %273 = vector.load %arg8[%c3_87, %c0_88, %c0_89] : memref<8x2x64xf32, #tpu.memory_space<vmem>>, vector<1x2x64xf32>
    %274 = vector.shape_cast %273 : vector<1x2x64xf32> to vector<2x64xf32>
    %275 = vector.extract_strided_slice %274 {offsets = [0, 32], sizes = [2, 32], strides = [1, 1]} : vector<2x64xf32> to vector<2x32xf32>
    %cst_90 = arith.constant dense<0.000000e+00> : vector<2x32xf32>
    %276 = tpu.matmul %272, %212, %cst_90 {dimension_numbers = #tpu.dot_dimension_numbers<[1], [1], [0], [0], [0, 0, 1, 0], [], []>} : vector<2x32xf32>, vector<32x32xf32>, vector<2x32xf32> -> vector<2x32xf32>
    %cst_91 = arith.constant dense<0.000000e+00> : vector<2x32xf32>
    %277 = tpu.matmul %275, %213, %cst_91 {dimension_numbers = #tpu.dot_dimension_numbers<[1], [1], [0], [0], [0, 0, 1, 0], [], []>} : vector<2x32xf32>, vector<32x32xf32>, vector<2x32xf32> -> vector<2x32xf32>
    %278 = arith.addf %276, %277 : vector<2x32xf32>
    %279 = arith.addf %278, %216 : vector<2x32xf32>
    %cst_92 = arith.constant 0.000000e+00 : f32
    %280 = vector.broadcast %cst_92 : f32 to vector<2x32xf32>
    %281 = arith.maximumf %279, %280 : vector<2x32xf32>
    %282 = arith.addf %269, %281 : vector<2x32xf32>
    %c5_93 = arith.constant 5 : index
    %c0_94 = arith.constant 0 : index
    %c0_95 = arith.constant 0 : index
    %283 = vector.load %arg8[%c5_93, %c0_94, %c0_95] : memref<8x2x64xf32, #tpu.memory_space<vmem>>, vector<1x2x64xf32>
    %284 = vector.shape_cast %283 : vector<1x2x64xf32> to vector<2x64xf32>
    %285 = vector.extract_strided_slice %284 {offsets = [0, 0], sizes = [2, 32], strides = [1, 1]} : vector<2x64xf32> to vector<2x32xf32>
    %c2_96 = arith.constant 2 : index
    %c0_97 = arith.constant 0 : index
    %c0_98 = arith.constant 0 : index
    %286 = vector.load %arg8[%c2_96, %c0_97, %c0_98] : memref<8x2x64xf32, #tpu.memory_space<vmem>>, vector<1x2x64xf32>
    %287 = vector.shape_cast %286 : vector<1x2x64xf32> to vector<2x64xf32>
    %288 = vector.extract_strided_slice %287 {offsets = [0, 32], sizes = [2, 32], strides = [1, 1]} : vector<2x64xf32> to vector<2x32xf32>
    %cst_99 = arith.constant dense<0.000000e+00> : vector<2x32xf32>
    %289 = tpu.matmul %285, %212, %cst_99 {dimension_numbers = #tpu.dot_dimension_numbers<[1], [1], [0], [0], [0, 0, 1, 0], [], []>} : vector<2x32xf32>, vector<32x32xf32>, vector<2x32xf32> -> vector<2x32xf32>
    %cst_100 = arith.constant dense<0.000000e+00> : vector<2x32xf32>
    %290 = tpu.matmul %288, %213, %cst_100 {dimension_numbers = #tpu.dot_dimension_numbers<[1], [1], [0], [0], [0, 0, 1, 0], [], []>} : vector<2x32xf32>, vector<32x32xf32>, vector<2x32xf32> -> vector<2x32xf32>
    %291 = arith.addf %289, %290 : vector<2x32xf32>
    %292 = arith.addf %291, %216 : vector<2x32xf32>
    %cst_101 = arith.constant 0.000000e+00 : f32
    %293 = vector.broadcast %cst_101 : f32 to vector<2x32xf32>
    %294 = arith.maximumf %292, %293 : vector<2x32xf32>
    %295 = arith.addf %282, %294 : vector<2x32xf32>
    %c6_102 = arith.constant 6 : index
    %c0_103 = arith.constant 0 : index
    %c0_104 = arith.constant 0 : index
    %296 = vector.load %arg8[%c6_102, %c0_103, %c0_104] : memref<8x2x64xf32, #tpu.memory_space<vmem>>, vector<1x2x64xf32>
    %297 = vector.shape_cast %296 : vector<1x2x64xf32> to vector<2x64xf32>
    %298 = vector.extract_strided_slice %297 {offsets = [0, 0], sizes = [2, 32], strides = [1, 1]} : vector<2x64xf32> to vector<2x32xf32>
    %c1_105 = arith.constant 1 : index
    %c0_106 = arith.constant 0 : index
    %c0_107 = arith.constant 0 : index
    %299 = vector.load %arg8[%c1_105, %c0_106, %c0_107] : memref<8x2x64xf32, #tpu.memory_space<vmem>>, vector<1x2x64xf32>
    %300 = vector.shape_cast %299 : vector<1x2x64xf32> to vector<2x64xf32>
    %301 = vector.extract_strided_slice %300 {offsets = [0, 32], sizes = [2, 32], strides = [1, 1]} : vector<2x64xf32> to vector<2x32xf32>
    %cst_108 = arith.constant dense<0.000000e+00> : vector<2x32xf32>
    %302 = tpu.matmul %298, %212, %cst_108 {dimension_numbers = #tpu.dot_dimension_numbers<[1], [1], [0], [0], [0, 0, 1, 0], [], []>} : vector<2x32xf32>, vector<32x32xf32>, vector<2x32xf32> -> vector<2x32xf32>
    %cst_109 = arith.constant dense<0.000000e+00> : vector<2x32xf32>
    %303 = tpu.matmul %301, %213, %cst_109 {dimension_numbers = #tpu.dot_dimension_numbers<[1], [1], [0], [0], [0, 0, 1, 0], [], []>} : vector<2x32xf32>, vector<32x32xf32>, vector<2x32xf32> -> vector<2x32xf32>
    %304 = arith.addf %302, %303 : vector<2x32xf32>
    %305 = arith.addf %304, %216 : vector<2x32xf32>
    %cst_110 = arith.constant 0.000000e+00 : f32
    %306 = vector.broadcast %cst_110 : f32 to vector<2x32xf32>
    %307 = arith.maximumf %305, %306 : vector<2x32xf32>
    %308 = arith.addf %295, %307 : vector<2x32xf32>
    %c7_111 = arith.constant 7 : index
    %c0_112 = arith.constant 0 : index
    %c0_113 = arith.constant 0 : index
    %309 = vector.load %arg8[%c7_111, %c0_112, %c0_113] : memref<8x2x64xf32, #tpu.memory_space<vmem>>, vector<1x2x64xf32>
    %310 = vector.shape_cast %309 : vector<1x2x64xf32> to vector<2x64xf32>
    %311 = vector.extract_strided_slice %310 {offsets = [0, 0], sizes = [2, 32], strides = [1, 1]} : vector<2x64xf32> to vector<2x32xf32>
    %c0_114 = arith.constant 0 : index
    %c0_115 = arith.constant 0 : index
    %c0_116 = arith.constant 0 : index
    %312 = vector.load %arg8[%c0_114, %c0_115, %c0_116] : memref<8x2x64xf32, #tpu.memory_space<vmem>>, vector<1x2x64xf32>
    %313 = vector.shape_cast %312 : vector<1x2x64xf32> to vector<2x64xf32>
    %314 = vector.extract_strided_slice %313 {offsets = [0, 32], sizes = [2, 32], strides = [1, 1]} : vector<2x64xf32> to vector<2x32xf32>
    %cst_117 = arith.constant dense<0.000000e+00> : vector<2x32xf32>
    %315 = tpu.matmul %311, %212, %cst_117 {dimension_numbers = #tpu.dot_dimension_numbers<[1], [1], [0], [0], [0, 0, 1, 0], [], []>} : vector<2x32xf32>, vector<32x32xf32>, vector<2x32xf32> -> vector<2x32xf32>
    %cst_118 = arith.constant dense<0.000000e+00> : vector<2x32xf32>
    %316 = tpu.matmul %314, %213, %cst_118 {dimension_numbers = #tpu.dot_dimension_numbers<[1], [1], [0], [0], [0, 0, 1, 0], [], []>} : vector<2x32xf32>, vector<32x32xf32>, vector<2x32xf32> -> vector<2x32xf32>
    %317 = arith.addf %315, %316 : vector<2x32xf32>
    %318 = arith.addf %317, %216 : vector<2x32xf32>
    %cst_119 = arith.constant 0.000000e+00 : f32
    %319 = vector.broadcast %cst_119 : f32 to vector<2x32xf32>
    %320 = arith.maximumf %318, %319 : vector<2x32xf32>
    %321 = arith.addf %308, %320 : vector<2x32xf32>
    %cst_120 = arith.constant 1.250000e-01 : f32
    %322 = vector.broadcast %cst_120 : f32 to vector<2x32xf32>
    %323 = arith.mulf %321, %322 : vector<2x32xf32>
    %c0_121 = arith.constant 0 : index
    %c0_122 = arith.constant 0 : index
    %324 = vector.load %arg5[%c0_121, %c0_122] : memref<2x32xf32, #tpu.memory_space<vmem>>, vector<2x32xf32>
    %cst_123 = arith.constant dense<0.000000e+00> : vector<2x2xf32>
    %325 = tpu.matmul %323, %324, %cst_123 {dimension_numbers = #tpu.dot_dimension_numbers<[1], [1], [0], [0], [0, 0, 1, 0], [], []>} : vector<2x32xf32>, vector<2x32xf32>, vector<2x2xf32> -> vector<2x2xf32>
    %c0_124 = arith.constant 0 : index
    %c0_125 = arith.constant 0 : index
    %326 = vector.load %arg6[%c0_124, %c0_125] : memref<1x2xf32, #tpu.memory_space<vmem>>, vector<1x2xf32>
    %327 = vector.broadcast %326 : vector<1x2xf32> to vector<2x2xf32>
    %328 = arith.addf %325, %327 : vector<2x2xf32>
    %cst_126 = arith.constant dense<0xFF800000> : vector<2xf32>
    %329 = vector.multi_reduction <maximumf>, %328, %cst_126 [1] : vector<2x2xf32> to vector<2xf32>
    %330 = vector.shape_cast %329 : vector<2xf32> to vector<2x1xf32>
    %331 = vector.broadcast %330 : vector<2x1xf32> to vector<2x2xf32>
    %332 = arith.subf %328, %331 : vector<2x2xf32>
    %333 = math.exp %332 : vector<2x2xf32>
    %cst_127 = arith.constant dense<0.000000e+00> : vector<2xf32>
    %334 = vector.multi_reduction <add>, %333, %cst_127 [1] : vector<2x2xf32> to vector<2xf32>
    %335 = vector.shape_cast %334 : vector<2xf32> to vector<2x1xf32>
    %336 = vector.broadcast %335 : vector<2x1xf32> to vector<2x2xf32>
    %337 = arith.divf %333, %336 : vector<2x2xf32>
    %c0_128 = arith.constant 0 : index
    %c0_129 = arith.constant 0 : index
    %338 = vector.load %arg7[%c0_128, %c0_129] : memref<2x2xf32, #tpu.memory_space<vmem>>, vector<2x2xf32>
    tpu.vector_store %arg7[%c0_128, %c0_129], %337 {strides = array<i32>} : memref<2x2xf32, #tpu.memory_space<vmem>>, vector<2x2xf32>,
    return
  }
  func.func @transform_0(%arg0: i32) -> (i32, i32, i32) {
    %c0_i32 = arith.constant 0 : i32
    %c0_i32_0 = arith.constant 0 : i32
    %c0_i32_1 = arith.constant 0 : i32
    %c0_i32_2 = arith.constant 0 : i32
    return %c0_i32, %c0_i32_0, %c0_i32_1 : i32, i32, i32
  }
  func.func @transform_1(%arg0: i32) -> (i32, i32) {
    %c0_i32 = arith.constant 0 : i32
    %c0_i32_0 = arith.constant 0 : i32
    %c0_i32_1 = arith.constant 0 : i32
    return %c0_i32, %c0_i32_0 : i32, i32
  }
  func.func @transform_2(%arg0: i32) -> (i32, i32) {
    %c0_i32 = arith.constant 0 : i32
    %c0_i32_0 = arith.constant 0 : i32
    %c0_i32_1 = arith.constant 0 : i32
    return %c0_i32, %c0_i32_0 : i32, i32
  }
  func.func @transform_3(%arg0: i32) -> (i32, i32) {
    %c0_i32 = arith.constant 0 : i32
    %c0_i32_0 = arith.constant 0 : i32
    %c0_i32_1 = arith.constant 0 : i32
    return %c0_i32, %c0_i32_0 : i32, i32
  }
  func.func @transform_4(%arg0: i32) -> (i32, i32) {
    %c0_i32 = arith.constant 0 : i32
    %c0_i32_0 = arith.constant 0 : i32
    %c0_i32_1 = arith.constant 0 : i32
    return %c0_i32, %c0_i32_0 : i32, i32
  }
  func.func @transform_5(%arg0: i32) -> (i32, i32) {
    %c0_i32 = arith.constant 0 : i32
    %c0_i32_0 = arith.constant 0 : i32
    %c0_i32_1 = arith.constant 0 : i32
    return %c0_i32, %c0_i32_0 : i32, i32
  }
  func.func @transform_6(%arg0: i32) -> (i32, i32) {
    %c0_i32 = arith.constant 0 : i32
    %c0_i32_0 = arith.constant 0 : i32
    %c0_i32_1 = arith.constant 0 : i32
    return %c0_i32, %c0_i32_0 : i32, i32
  }
}

</mosaic_0001>

<llo_original>
// kernel: sentence_match_forward.1
$region0: #{sentence_match_forward.1}
  #allocation0 [shape = 'u32[]', space=smem, size = 0x4, offset = 0x4, fixed_abs, tag = 'smem constant byte address 0x4 - core index']
  #allocation1 [shape = 'u32[72,128]{1,0:T(1,128)}', space=vmem, size = 0x9000, scoped, tag = 'internal scratch']
  #allocation2 [shape = 'f32[8,2,64]{2,1,0:T(2,128)}', space=vmem, size = 0x2000, scoped, tag = 'scratch operand']
  %s0 = inlined_call_operand.vmem [shape: f32[8,2,256], index: 0, kind: input, shape index: {}]
  %s1 = inlined_call_operand.vmem [shape: bf16[64,256], index: 1, kind: input, shape index: {}]
  %s2 = inlined_call_operand.vmem [shape: f32[32,64], index: 2, kind: input, shape index: {}]
  %s3 = inlined_call_operand.vmem [shape: f32[1,32], index: 3, kind: input, shape index: {}]
  %s4 = inlined_call_operand.vmem [shape: f32[2,32], index: 4, kind: input, shape index: {}]
  %s5 = inlined_call_operand.vmem [shape: f32[1,2], index: 5, kind: input, shape index: {}]
  %s6 = inlined_call_operand.hbm [shape: f32[2,2], index: 6, kind: output, shape index: {}]
  %s7 = sld [smem:[#allocation0]]
  $region34: #{sentence_match_forward.1} parent=0
    _
  %s9 = ssub.s32 1, %s7
  %s10 = scalar_select 0, %s9, %s7
  $region1: #{sentence_match_forward.1} parent=0
    #allocation3 [shape = 'u8[1024]{0}', space=vmem, size = 0x400, scoped, tag = 'output window, operand 0, single buffered']
    #allocation4 [shape = 's32[1]{0}', space=sflag, size = 0x4, scoped, tag = 'scoped memory for sentence_match_forward.1']
    %11 = vsyncpa [#allocation4], 0
    // Predicated region
    $region2: #{sentence_match_forward.1} parent=1 // pred_check
      _
    $region3: #{sentence_match_forward.1} parent=1 // pred_check_branch
      %13 = sbr.rel (0) target = $region5
    $region4: #{sentence_match_forward.1} parent=1 // pred_region
      _
    $region5: #{sentence_match_forward.1} parent=1 // pred_fallthru
      _
    // Predicated region
    $region6: #{sentence_match_forward.1} parent=1 // pred_check
      _
    $region7: #{sentence_match_forward.1} parent=1 // pred_check_branch
      %15 = sbr.rel (0) target = $region9
    $region8: #{sentence_match_forward.1} parent=1 // pred_region
      _
    $region9: #{sentence_match_forward.1} parent=1 // pred_fallthru
      _
    // Predicated region
    $region10: #{sentence_match_forward.1} parent=1 // pred_check
      _
    $region11: #{sentence_match_forward.1} parent=1 // pred_check_branch
      %17 = sbr.rel (0) target = $region13
    $region12: #{sentence_match_forward.1} parent=1 // pred_region
      _
    $region13: #{sentence_match_forward.1} parent=1 // pred_fallthru
      _
    // Predicated region
    $region14: #{sentence_match_forward.1} parent=1 // pred_check
      _
    $region15: #{sentence_match_forward.1} parent=1 // pred_check_branch
      %19 = sbr.rel (0) target = $region17
    $region16: #{sentence_match_forward.1} parent=1 // pred_region
      _
    $region17: #{sentence_match_forward.1} parent=1 // pred_fallthru
      _
    // Predicated region
    $region18: #{sentence_match_forward.1} parent=1 // pred_check
      _
    $region19: #{sentence_match_forward.1} parent=1 // pred_check_branch
      %21 = sbr.rel (0) target = $region21
    $region20: #{sentence_match_forward.1} parent=1 // pred_region
      _
    $region21: #{sentence_match_forward.1} parent=1 // pred_fallthru
      _
    // Predicated region
    $region22: #{sentence_match_forward.1} parent=1 // pred_check
      _
    $region23: #{sentence_match_forward.1} parent=1 // pred_check_branch
      %23 = sbr.rel (0) target = $region25
    $region24: #{sentence_match_forward.1} parent=1 // pred_region
      _
    $region25: #{sentence_match_forward.1} parent=1 // pred_fallthru
      _
    %v25 = vld [vmem:[%s1] sm:$0xff]
    %v26 = vld [vmem:[%s1 + $0x8] sm:$0xff]
    %v27 = vld [vmem:[%s1 + $0x10] sm:$0xff]
    %v28 = vld [vmem:[%s1 + $0x18] sm:$0xff]
    %v29 = vld [vmem:[%s1 + $0x20] sm:$0xff]
    %v30 = vld [vmem:[%s1 + $0x28] sm:$0xff]
    %v31 = vld [vmem:[%s1 + $0x30] sm:$0xff]
    %v32 = vld [vmem:[%s1 + $0x38] sm:$0xff]
    %v33 = vld [vmem:[%s0] sm:$0xf]
    %v42 = vunpack.c.l.b16 %v25
    %v43 = vunpack.c.h.b16 %v25
    %v44 = vunpack.c.l.b16 %v26
    %v45 = vunpack.c.h.b16 %v26
    %v46 = vunpack.c.l.b16 %v27
    %v47 = vunpack.c.h.b16 %v27
    %v48 = vunpack.c.l.b16 %v28
    %v49 = vunpack.c.h.b16 %v28
    %v50 = vunpack.c.l.b16 %v29
    %v51 = vunpack.c.h.b16 %v29
    %v52 = vunpack.c.l.b16 %v30
    %v53 = vunpack.c.h.b16 %v30
    %v54 = vunpack.c.l.b16 %v31
    %v55 = vunpack.c.h.b16 %v31
    %v56 = vunpack.c.l.b16 %v32
    %v57 = vunpack.c.h.b16 %v32
    %v58 = vpack.c.b16 %v44, %v42
    %v59 = vpack.c.b16 %v45, %v43
    %v60 = vpack.c.b16 %v48, %v46
    %v61 = vpack.c.b16 %v49, %v47
    %v62 = vpack.c.b16 %v52, %v50
    %v63 = vpack.c.b16 %v53, %v51
    %v64 = vpack.c.b16 %v56, %v54
    %v65 = vpack.c.b16 %v57, %v55
    %vm74 = vcmask 523264
    %v76 = vsel %vm74, 0, 0
    %78 = vmatpush.bf16.msra.mxu0 0
    %79 = vmatpush.bf16.msra.mxu0 0
    %80 = vmatpush.bf16.msra.mxu0 0
    %81 = vmatpush.bf16.msra.mxu0 0
    %82 = vmatpush.bf16.msra.mxu0 %v64
    %83 = vmatpush.bf16.msra.mxu0 %v62
    %84 = vmatpush.bf16.msra.mxu0 %v60
    %85 = vmatpush.bf16.msra.mxu0 %v58
    %86 = vmatmul.bf16.gmra.mxu0 %v76
    %v87 = vpop.f32.mrf.mxu0
    %v88 = vadd.f32 0.0, %v87
    %v89 = vpop.f32.mrf.mxu0
    %90 = vdwg.mxu0
    %91 = vmatpush.bf16.msra.mxu0 0
    %92 = vmatpush.bf16.msra.mxu0 0
    %93 = vmatpush.bf16.msra.mxu0 0
    %94 = vmatpush.bf16.msra.mxu0 0
    %95 = vmatpush.bf16.msra.mxu0 %v65
    %96 = vmatpush.bf16.msra.mxu0 %v63
    %97 = vmatpush.bf16.msra.mxu0 %v61
    %98 = vmatpush.bf16.msra.mxu0 %v59
    %99 = vmatmul.bf16.gmra.mxu0 %v76
    %v100 = vpop.f32.mrf.mxu0
    %v101 = vadd.f32 0.0, %v100
    %v102 = vpop.f32.mrf.mxu0
    %103 = vdwg.mxu0
    %v106 = vrot.slane %v101, 6
    %vm107 = vcmask 1041408
    %v108 = vsel %vm107, %v88, %v106
    %v110 = vadd.f32 %v33, %v108
    %v111 = vxor.u32 %v110, 2147483648
    %v112 = vmul.f32 %v111, 1.442695
    %v113 = vpow.pop %v112
    %v114 = vadd.f32 %v113, 1.0
    %v115 = vrcp.pop %v114
    %v116 = vmul.f32 %v114, %v115
    %v117 = vsub.f32 1.0, %v116
    %v118 = vmul.f32 %v115, %v117
    %v119 = vadd.f32 %v115, %v118
    %vm120 = vweird.f32 %v114
    %vm121 = vweird.f32 %v115
    %vm122 = vmor %vm120, %vm121
    %v123 = vsel %vm122, %v115, %v119
    %v124 = vand.u32 2147483647, %v114
    %vm125 = vcmp.eq.f32.partialorder %v124, 8.507059e+37
    %v126 = vand.u32 %v114, 2147483648
    %v127 = vor.u32 1.1754944e-38, %v126
    %v128 = vsel %vm125, %v127, %v123
    %v129 = vmul.f32 1.0, %v128
    %131 = vrot.lane.b32.xlu0 %v110, 64
    %v132 = vpop.permute.xlu0 %131
    %v133 = vrot.slane %v132, 2
    %v135 = vtanh.pop %v133
    %v136 = vmul.f32 %v129, 0.0
    %v137 = vmul.f32 %v129, %v135
    %139 = vrot.lane.b32.xlu0 %v137, 64
    %v140 = vpop.permute.xlu0 %139
    %v142 = vadd.f32 %v136, %v140
    %v143 = vtanh.pop %v142
    %v145 = vrot.slane %v129, 2
    %148 = vrot.lane.b32.xlu0 %v143, 64
    %v149 = vpop.permute.xlu0 %148
    %v151 = vmul.f32 %v145, %v149
    %vm152 = vcmask 517120
    %153 = vst.msk [vmem:[#allocation2] sm:$0x3] %vm152, %v151
    %s154 = scalar_lea.vmem %s0, 4
    %v155 = vld [vmem:[%s154] sm:$0xf]
    %v156 = vpack.c.bf16 %v151, %v151
    %v158 = vsel %vm74, %v156, 0
    %160 = vmatpush.bf16.msra.mxu0 0
    %161 = vmatpush.bf16.msra.mxu0 0
    %162 = vmatpush.bf16.msra.mxu0 0
    %163 = vmatpush.bf16.msra.mxu0 0
    %164 = vmatpush.bf16.msra.mxu0 %v64
    %165 = vmatpush.bf16.msra.mxu0 %v62
    %166 = vmatpush.bf16.msra.mxu0 %v60
    %167 = vmatpush.bf16.msra.mxu0 %v58
    %168 = vmatmul.bf16.gmra.mxu0 %v158
    %v169 = vpop.f32.mrf.mxu0
    %v170 = vadd.f32 0.0, %v169
    %v171 = vpop.f32.mrf.mxu0
    %172 = vdwg.mxu0
    %173 = vmatpush.bf16.msra.mxu0 0
    %174 = vmatpush.bf16.msra.mxu0 0
    %175 = vmatpush.bf16.msra.mxu0 0
    %176 = vmatpush.bf16.msra.mxu0 0
    %177 = vmatpush.bf16.msra.mxu0 %v65
    %178 = vmatpush.bf16.msra.mxu0 %v63
    %179 = vmatpush.bf16.msra.mxu0 %v61
    %180 = vmatpush.bf16.msra.mxu0 %v59
    %181 = vmatmul.bf16.gmra.mxu0 %v158
    %v182 = vpop.f32.mrf.mxu0
    %v183 = vadd.f32 0.0, %v182
    %v184 = vpop.f32.mrf.mxu0
    %185 = vdwg.mxu0
    %v188 = vrot.slane %v183, 6
    %v189 = vsel %vm107, %v170, %v188
    %v191 = vadd.f32 %v155, %v189
    %v192 = vxor.u32 %v191, 2147483648
    %v193 = vmul.f32 %v192, 1.442695
    %v194 = vpow.pop %v193
    %v195 = vadd.f32 %v194, 1.0
    %v196 = vrcp.pop %v195
    %v197 = vmul.f32 %v195, %v196
    %v198 = vsub.f32 1.0, %v197
    %v199 = vmul.f32 %v196, %v198
    %v200 = vadd.f32 %v196, %v199
    %vm201 = vweird.f32 %v195
    %vm202 = vweird.f32 %v196
    %vm203 = vmor %vm201, %vm202
    %v204 = vsel %vm203, %v196, %v200
    %v205 = vand.u32 2147483647, %v195
    %vm206 = vcmp.eq.f32.partialorder %v205, 8.507059e+37
    %v207 = vand.u32 %v195, 2147483648
    %v208 = vor.u32 1.1754944e-38, %v207
    %v209 = vsel %vm206, %v208, %v204
    %v210 = vmul.f32 1.0, %v209
    %212 = vrot.lane.b32.xlu0 %v191, 64
    %v213 = vpop.permute.xlu0 %212
    %v214 = vrot.slane %v213, 2
    %v216 = vtanh.pop %v214
    %v217 = vmul.f32 %v210, %v142
    %v218 = vmul.f32 %v210, %v216
    %220 = vrot.lane.b32.xlu0 %v218, 64
    %v221 = vpop.permute.xlu0 %220
    %v223 = vadd.f32 %v217, %v221
    %v224 = vtanh.pop %v223
    %v226 = vrot.slane %v210, 2
    %229 = vrot.lane.b32.xlu0 %v224, 64
    %v230 = vpop.permute.xlu0 %229
    %v232 = vmul.f32 %v226, %v230
    %s233 = scalar_lea.vmem [#allocation2], 2
    %234 = vst.msk [vmem:[%s233] sm:$0x3] %vm152, %v232
    %s235 = scalar_lea.vmem %s0, 8
    %v236 = vld [vmem:[%s235] sm:$0xf]
    %v237 = vpack.c.bf16 %v232, %v232
    %v239 = vsel %vm74, %v237, 0
    %241 = vmatpush.bf16.msra.mxu0 0
    %242 = vmatpush.bf16.msra.mxu0 0
    %243 = vmatpush.bf16.msra.mxu0 0
    %244 = vmatpush.bf16.msra.mxu0 0
    %245 = vmatpush.bf16.msra.mxu0 %v64
    %246 = vmatpush.bf16.msra.mxu0 %v62
    %247 = vmatpush.bf16.msra.mxu0 %v60
    %248 = vmatpush.bf16.msra.mxu0 %v58
    %249 = vmatmul.bf16.gmra.mxu0 %v239
    %v250 = vpop.f32.mrf.mxu0
    %v251 = vadd.f32 0.0, %v250
    %v252 = vpop.f32.mrf.mxu0
    %253 = vdwg.mxu0
    %254 = vmatpush.bf16.msra.mxu0 0
    %255 = vmatpush.bf16.msra.mxu0 0
    %256 = vmatpush.bf16.msra.mxu0 0
    %257 = vmatpush.bf16.msra.mxu0 0
    %258 = vmatpush.bf16.msra.mxu0 %v65
    %259 = vmatpush.bf16.msra.mxu0 %v63
    %260 = vmatpush.bf16.msra.mxu0 %v61
    %261 = vmatpush.bf16.msra.mxu0 %v59
    %262 = vmatmul.bf16.gmra.mxu0 %v239
    %v263 = vpop.f32.mrf.mxu0
    %v264 = vadd.f32 0.0, %v263
    %v265 = vpop.f32.mrf.mxu0
    %266 = vdwg.mxu0
    %v269 = vrot.slane %v264, 6
    %v270 = vsel %vm107, %v251, %v269
    %v272 = vadd.f32 %v236, %v270
    %v273 = vxor.u32 %v272, 2147483648
    %v274 = vmul.f32 %v273, 1.442695
    %v275 = vpow.pop %v274
    %v276 = vadd.f32 %v275, 1.0
    %v277 = vrcp.pop %v276
    %v278 = vmul.f32 %v276, %v277
    %v279 = vsub.f32 1.0, %v278
    %v280 = vmul.f32 %v277, %v279
    %v281 = vadd.f32 %v277, %v280
    %vm282 = vweird.f32 %v276
    %vm283 = vweird.f32 %v277
    %vm284 = vmor %vm282, %vm283
    %v285 = vsel %vm284, %v277, %v281
    %v286 = vand.u32 2147483647, %v276
    %vm287 = vcmp.eq.f32.partialorder %v286, 8.507059e+37
    %v288 = vand.u32 %v276, 2147483648
    %v289 = vor.u32 1.1754944e-38, %v288
    %v290 = vsel %vm287, %v289, %v285
    %v291 = vmul.f32 1.0, %v290
    %293 = vrot.lane.b32.xlu0 %v272, 64
    %v294 = vpop.permute.xlu0 %293
    %v295 = vrot.slane %v294, 2
    %v297 = vtanh.pop %v295
    %v298 = vmul.f32 %v291, %v223
    %v299 = vmul.f32 %v291, %v297
    %301 = vrot.lane.b32.xlu0 %v299, 64
    %v302 = vpop.permute.xlu0 %301
    %v304 = vadd.f32 %v298, %v302
    %v305 = vtanh.pop %v304
    %v307 = vrot.slane %v291, 2
    %310 = vrot.lane.b32.xlu0 %v305, 64
    %v311 = vpop.permute.xlu0 %310
    %v313 = vmul.f32 %v307, %v311
    %s314 = scalar_lea.vmem [#allocation2], 4
    %315 = vst.msk [vmem:[%s314] sm:$0x3] %vm152, %v313
    %s316 = scalar_lea.vmem %s0, 12
    %v317 = vld [vmem:[%s316] sm:$0xf]
    %v318 = vpack.c.bf16 %v313, %v313
    %v320 = vsel %vm74, %v318, 0
    %322 = vmatpush.bf16.msra.mxu0 0
    %323 = vmatpush.bf16.msra.mxu0 0
    %324 = vmatpush.bf16.msra.mxu0 0
    %325 = vmatpush.bf16.msra.mxu0 0
    %326 = vmatpush.bf16.msra.mxu0 %v64
    %327 = vmatpush.bf16.msra.mxu0 %v62
    %328 = vmatpush.bf16.msra.mxu0 %v60
    %329 = vmatpush.bf16.msra.mxu0 %v58
    %330 = vmatmul.bf16.gmra.mxu0 %v320
    %v331 = vpop.f32.mrf.mxu0
    %v332 = vadd.f32 0.0, %v331
    %v333 = vpop.f32.mrf.mxu0
    %334 = vdwg.mxu0
    %335 = vmatpush.bf16.msra.mxu0 0
    %336 = vmatpush.bf16.msra.mxu0 0
    %337 = vmatpush.bf16.msra.mxu0 0
    %338 = vmatpush.bf16.msra.mxu0 0
    %339 = vmatpush.bf16.msra.mxu0 %v65
    %340 = vmatpush.bf16.msra.mxu0 %v63
    %341 = vmatpush.bf16.msra.mxu0 %v61
    %342 = vmatpush.bf16.msra.mxu0 %v59
    %343 = vmatmul.bf16.gmra.mxu0 %v320
    %v344 = vpop.f32.mrf.mxu0
    %v345 = vadd.f32 0.0, %v344
    %v346 = vpop.f32.mrf.mxu0
    %347 = vdwg.mxu0
    %v350 = vrot.slane %v345, 6
    %v351 = vsel %vm107, %v332, %v350
    %v353 = vadd.f32 %v317, %v351
    %v354 = vxor.u32 %v353, 2147483648
    %v355 = vmul.f32 %v354, 1.442695
    %v356 = vpow.pop %v355
    %v357 = vadd.f32 %v356, 1.0
    %v358 = vrcp.pop %v357
    %v359 = vmul.f32 %v357, %v358
    %v360 = vsub.f32 1.0, %v359
    %v361 = vmul.f32 %v358, %v360
    %v362 = vadd.f32 %v358, %v361
    %vm363 = vweird.f32 %v357
    %vm364 = vweird.f32 %v358
    %vm365 = vmor %vm363, %vm364
    %v366 = vsel %vm365, %v358, %v362
    %v367 = vand.u32 2147483647, %v357
    %vm368 = vcmp.eq.f32.partialorder %v367, 8.507059e+37
    %v369 = vand.u32 %v357, 2147483648
    %v370 = vor.u32 1.1754944e-38, %v369
    %v371 = vsel %vm368, %v370, %v366
    %v372 = vmul.f32 1.0, %v371
    %374 = vrot.lane.b32.xlu0 %v353, 64
    %v375 = vpop.permute.xlu0 %374
    %v376 = vrot.slane %v375, 2
    %v378 = vtanh.pop %v376
    %v379 = vmul.f32 %v372, %v304
    %v380 = vmul.f32 %v372, %v378
    %382 = vrot.lane.b32.xlu0 %v380, 64
    %v383 = vpop.permute.xlu0 %382
    %v385 = vadd.f32 %v379, %v383
    %v386 = vtanh.pop %v385
    %v388 = vrot.slane %v372, 2
    %391 = vrot.lane.b32.xlu0 %v386, 64
    %v392 = vpop.permute.xlu0 %391
    %v394 = vmul.f32 %v388, %v392
    %s395 = scalar_lea.vmem [#allocation2], 6
    %396 = vst.msk [vmem:[%s395] sm:$0x3] %vm152, %v394
    %s397 = scalar_lea.vmem %s0, 16
    %v398 = vld [vmem:[%s397] sm:$0xf]
    %v399 = vpack.c.bf16 %v394, %v394
    %v401 = vsel %vm74, %v399, 0
    %403 = vmatpush.bf16.msra.mxu0 0
    %404 = vmatpush.bf16.msra.mxu0 0
    %405 = vmatpush.bf16.msra.mxu0 0
    %406 = vmatpush.bf16.msra.mxu0 0
    %407 = vmatpush.bf16.msra.mxu0 %v64
    %408 = vmatpush.bf16.msra.mxu0 %v62
    %409 = vmatpush.bf16.msra.mxu0 %v60
    %410 = vmatpush.bf16.msra.mxu0 %v58
    %411 = vmatmul.bf16.gmra.mxu0 %v401
    %v412 = vpop.f32.mrf.mxu0
    %v413 = vadd.f32 0.0, %v412
    %v414 = vpop.f32.mrf.mxu0
    %415 = vdwg.mxu0
    %416 = vmatpush.bf16.msra.mxu0 0
    %417 = vmatpush.bf16.msra.mxu0 0
    %418 = vmatpush.bf16.msra.mxu0 0
    %419 = vmatpush.bf16.msra.mxu0 0
    %420 = vmatpush.bf16.msra.mxu0 %v65
    %421 = vmatpush.bf16.msra.mxu0 %v63
    %422 = vmatpush.bf16.msra.mxu0 %v61
    %423 = vmatpush.bf16.msra.mxu0 %v59
    %424 = vmatmul.bf16.gmra.mxu0 %v401
    %v425 = vpop.f32.mrf.mxu0
    %v426 = vadd.f32 0.0, %v425
    %v427 = vpop.f32.mrf.mxu0
    %428 = vdwg.mxu0
    %v431 = vrot.slane %v426, 6
    %v432 = vsel %vm107, %v413, %v431
    %v434 = vadd.f32 %v398, %v432
    %v435 = vxor.u32 %v434, 2147483648
    %v436 = vmul.f32 %v435, 1.442695
    %v437 = vpow.pop %v436
    %v438 = vadd.f32 %v437, 1.0
    %v439 = vrcp.pop %v438
    %v440 = vmul.f32 %v438, %v439
    %v441 = vsub.f32 1.0, %v440
    %v442 = vmul.f32 %v439, %v441
    %v443 = vadd.f32 %v439, %v442
    %vm444 = vweird.f32 %v438
    %vm445 = vweird.f32 %v439
    %vm446 = vmor %vm444, %vm445
    %v447 = vsel %vm446, %v439, %v443
    %v448 = vand.u32 2147483647, %v438
    %vm449 = vcmp.eq.f32.partialorder %v448, 8.507059e+37
    %v450 = vand.u32 %v438, 2147483648
    %v451 = vor.u32 1.1754944e-38, %v450
    %v452 = vsel %vm449, %v451, %v447
    %v453 = vmul.f32 1.0, %v452
    %455 = vrot.lane.b32.xlu0 %v434, 64
    %v456 = vpop.permute.xlu0 %455
    %v457 = vrot.slane %v456, 2
    %v459 = vtanh.pop %v457
    %v460 = vmul.f32 %v453, %v385
    %v461 = vmul.f32 %v453, %v459
    %463 = vrot.lane.b32.xlu0 %v461, 64
    %v464 = vpop.permute.xlu0 %463
    %v466 = vadd.f32 %v460, %v464
    %v467 = vtanh.pop %v466
    %v469 = vrot.slane %v453, 2
    %472 = vrot.lane.b32.xlu0 %v467, 64
    %v473 = vpop.permute.xlu0 %472
    %v475 = vmul.f32 %v469, %v473
    %s476 = scalar_lea.vmem [#allocation2], 8
    %477 = vst.msk [vmem:[%s476] sm:$0x3] %vm152, %v475
    %s478 = scalar_lea.vmem %s0, 20
    %v479 = vld [vmem:[%s478] sm:$0xf]
    %v480 = vpack.c.bf16 %v475, %v475
    %v482 = vsel %vm74, %v480, 0
    %484 = vmatpush.bf16.msra.mxu0 0
    %485 = vmatpush.bf16.msra.mxu0 0
    %486 = vmatpush.bf16.msra.mxu0 0
    %487 = vmatpush.bf16.msra.mxu0 0
    %488 = vmatpush.bf16.msra.mxu0 %v64
    %489 = vmatpush.bf16.msra.mxu0 %v62
    %490 = vmatpush.bf16.msra.mxu0 %v60
    %491 = vmatpush.bf16.msra.mxu0 %v58
    %492 = vmatmul.bf16.gmra.mxu0 %v482
    %v493 = vpop.f32.mrf.mxu0
    %v494 = vadd.f32 0.0, %v493
    %v495 = vpop.f32.mrf.mxu0
    %496 = vdwg.mxu0
    %497 = vmatpush.bf16.msra.mxu0 0
    %498 = vmatpush.bf16.msra.mxu0 0
    %499 = vmatpush.bf16.msra.mxu0 0
    %500 = vmatpush.bf16.msra.mxu0 0
    %501 = vmatpush.bf16.msra.mxu0 %v65
    %502 = vmatpush.bf16.msra.mxu0 %v63
    %503 = vmatpush.bf16.msra.mxu0 %v61
    %504 = vmatpush.bf16.msra.mxu0 %v59
    %505 = vmatmul.bf16.gmra.mxu0 %v482
    %v506 = vpop.f32.mrf.mxu0
    %v507 = vadd.f32 0.0, %v506
    %v508 = vpop.f32.mrf.mxu0
    %509 = vdwg.mxu0
    %v512 = vrot.slane %v507, 6
    %v513 = vsel %vm107, %v494, %v512
    %v515 = vadd.f32 %v479, %v513
    %v516 = vxor.u32 %v515, 2147483648
    %v517 = vmul.f32 %v516, 1.442695
    %v518 = vpow.pop %v517
    %v519 = vadd.f32 %v518, 1.0
    %v520 = vrcp.pop %v519
    %v521 = vmul.f32 %v519, %v520
    %v522 = vsub.f32 1.0, %v521
    %v523 = vmul.f32 %v520, %v522
    %v524 = vadd.f32 %v520, %v523
    %vm525 = vweird.f32 %v519
    %vm526 = vweird.f32 %v520
    %vm527 = vmor %vm525, %vm526
    %v528 = vsel %vm527, %v520, %v524
    %v529 = vand.u32 2147483647, %v519
    %vm530 = vcmp.eq.f32.partialorder %v529, 8.507059e+37
    %v531 = vand.u32 %v519, 2147483648
    %v532 = vor.u32 1.1754944e-38, %v531
    %v533 = vsel %vm530, %v532, %v528
    %v534 = vmul.f32 1.0, %v533
    %536 = vrot.lane.b32.xlu0 %v515, 64
    %v537 = vpop.permute.xlu0 %536
    %v538 = vrot.slane %v537, 2
    %v540 = vtanh.pop %v538
    %v541 = vmul.f32 %v534, %v466
    %v542 = vmul.f32 %v534, %v540
    %544 = vrot.lane.b32.xlu0 %v542, 64
    %v545 = vpop.permute.xlu0 %544
    %v547 = vadd.f32 %v541, %v545
    %v548 = vtanh.pop %v547
    %v550 = vrot.slane %v534, 2
    %553 = vrot.lane.b32.xlu0 %v548, 64
    %v554 = vpop.permute.xlu0 %553
    %v556 = vmul.f32 %v550, %v554
    %s557 = scalar_lea.vmem [#allocation2], 10
    %558 = vst.msk [vmem:[%s557] sm:$0x3] %vm152, %v556
    %s559 = scalar_lea.vmem %s0, 24
    %v560 = vld [vmem:[%s559] sm:$0xf]
    %v561 = vpack.c.bf16 %v556, %v556
    %v563 = vsel %vm74, %v561, 0
    %565 = vmatpush.bf16.msra.mxu0 0
    %566 = vmatpush.bf16.msra.mxu0 0
    %567 = vmatpush.bf16.msra.mxu0 0
    %568 = vmatpush.bf16.msra.mxu0 0
    %569 = vmatpush.bf16.msra.mxu0 %v64
    %570 = vmatpush.bf16.msra.mxu0 %v62
    %571 = vmatpush.bf16.msra.mxu0 %v60
    %572 = vmatpush.bf16.msra.mxu0 %v58
    %573 = vmatmul.bf16.gmra.mxu0 %v563
    %v574 = vpop.f32.mrf.mxu0
    %v575 = vadd.f32 0.0, %v574
    %v576 = vpop.f32.mrf.mxu0
    %577 = vdwg.mxu0
    %578 = vmatpush.bf16.msra.mxu0 0
    %579 = vmatpush.bf16.msra.mxu0 0
    %580 = vmatpush.bf16.msra.mxu0 0
    %581 = vmatpush.bf16.msra.mxu0 0
    %582 = vmatpush.bf16.msra.mxu0 %v65
    %583 = vmatpush.bf16.msra.mxu0 %v63
    %584 = vmatpush.bf16.msra.mxu0 %v61
    %585 = vmatpush.bf16.msra.mxu0 %v59
    %586 = vmatmul.bf16.gmra.mxu0 %v563
    %v587 = vpop.f32.mrf.mxu0
    %v588 = vadd.f32 0.0, %v587
    %v589 = vpop.f32.mrf.mxu0
    %590 = vdwg.mxu0
    %v593 = vrot.slane %v588, 6
    %v594 = vsel %vm107, %v575, %v593
    %v596 = vadd.f32 %v560, %v594
    %v597 = vxor.u32 %v596, 2147483648
    %v598 = vmul.f32 %v597, 1.442695
    %v599 = vpow.pop %v598
    %v600 = vadd.f32 %v599, 1.0
    %v601 = vrcp.pop %v600
    %v602 = vmul.f32 %v600, %v601
    %v603 = vsub.f32 1.0, %v602
    %v604 = vmul.f32 %v601, %v603
    %v605 = vadd.f32 %v601, %v604
    %vm606 = vweird.f32 %v600
    %vm607 = vweird.f32 %v601
    %vm608 = vmor %vm606, %vm607
    %v609 = vsel %vm608, %v601, %v605
    %v610 = vand.u32 2147483647, %v600
    %vm611 = vcmp.eq.f32.partialorder %v610, 8.507059e+37
    %v612 = vand.u32 %v600, 2147483648
    %v613 = vor.u32 1.1754944e-38, %v612
    %v614 = vsel %vm611, %v613, %v609
    %v615 = vmul.f32 1.0, %v614
    %617 = vrot.lane.b32.xlu0 %v596, 64
    %v618 = vpop.permute.xlu0 %617
    %v619 = vrot.slane %v618, 2
    %v621 = vtanh.pop %v619
    %v622 = vmul.f32 %v615, %v547
    %v623 = vmul.f32 %v615, %v621
    %625 = vrot.lane.b32.xlu0 %v623, 64
    %v626 = vpop.permute.xlu0 %625
    %v628 = vadd.f32 %v622, %v626
    %v629 = vtanh.pop %v628
    %v631 = vrot.slane %v615, 2
    %634 = vrot.lane.b32.xlu0 %v629, 64
    %v635 = vpop.permute.xlu0 %634
    %v637 = vmul.f32 %v631, %v635
    %s638 = scalar_lea.vmem [#allocation2], 12
    %639 = vst.msk [vmem:[%s638] sm:$0x3] %vm152, %v637
    %s640 = scalar_lea.vmem %s0, 28
    %v641 = vld [vmem:[%s640] sm:$0xf]
    %v642 = vpack.c.bf16 %v637, %v637
    %v644 = vsel %vm74, %v642, 0
    %646 = vmatpush.bf16.msra.mxu0 0
    %647 = vmatpush.bf16.msra.mxu0 0
    %648 = vmatpush.bf16.msra.mxu0 0
    %649 = vmatpush.bf16.msra.mxu0 0
    %650 = vmatpush.bf16.msra.mxu0 %v64
    %651 = vmatpush.bf16.msra.mxu0 %v62
    %652 = vmatpush.bf16.msra.mxu0 %v60
    %653 = vmatpush.bf16.msra.mxu0 %v58
    %654 = vmatmul.bf16.gmra.mxu0 %v644
    %v655 = vpop.f32.mrf.mxu0
    %v656 = vadd.f32 0.0, %v655
    %v657 = vpop.f32.mrf.mxu0
    %658 = vdwg.mxu0
    %659 = vmatpush.bf16.msra.mxu0 0
    %660 = vmatpush.bf16.msra.mxu0 0
    %661 = vmatpush.bf16.msra.mxu0 0
    %662 = vmatpush.bf16.msra.mxu0 0
    %663 = vmatpush.bf16.msra.mxu0 %v65
    %664 = vmatpush.bf16.msra.mxu0 %v63
    %665 = vmatpush.bf16.msra.mxu0 %v61
    %666 = vmatpush.bf16.msra.mxu0 %v59
    %667 = vmatmul.bf16.gmra.mxu0 %v644
    %v668 = vpop.f32.mrf.mxu0
    %v669 = vadd.f32 0.0, %v668
    %v670 = vpop.f32.mrf.mxu0
    %671 = vdwg.mxu0
    %v674 = vrot.slane %v669, 6
    %v675 = vsel %vm107, %v656, %v674
    %v677 = vadd.f32 %v641, %v675
    %v678 = vxor.u32 %v677, 2147483648
    %v679 = vmul.f32 %v678, 1.442695
    %v680 = vpow.pop %v679
    %v681 = vadd.f32 %v680, 1.0
    %v682 = vrcp.pop %v681
    %v683 = vmul.f32 %v681, %v682
    %v684 = vsub.f32 1.0, %v683
    %v685 = vmul.f32 %v682, %v684
    %v686 = vadd.f32 %v682, %v685
    %vm687 = vweird.f32 %v681
    %vm688 = vweird.f32 %v682
    %vm689 = vmor %vm687, %vm688
    %v690 = vsel %vm689, %v682, %v686
    %v691 = vand.u32 2147483647, %v681
    %vm692 = vcmp.eq.f32.partialorder %v691, 8.507059e+37
    %v693 = vand.u32 %v681, 2147483648
    %v694 = vor.u32 1.1754944e-38, %v693
    %v695 = vsel %vm692, %v694, %v690
    %v696 = vmul.f32 1.0, %v695
    %698 = vrot.lane.b32.xlu0 %v677, 64
    %v699 = vpop.permute.xlu0 %698
    %v700 = vrot.slane %v699, 2
    %v702 = vtanh.pop %v700
    %v703 = vmul.f32 %v696, %v628
    %v704 = vmul.f32 %v696, %v702
    %706 = vrot.lane.b32.xlu0 %v704, 64
    %v707 = vpop.permute.xlu0 %706
    %v709 = vadd.f32 %v703, %v707
    %v710 = vtanh.pop %v709
    %v712 = vrot.slane %v696, 2
    %715 = vrot.lane.b32.xlu0 %v710, 64
    %v716 = vpop.permute.xlu0 %715
    %v718 = vmul.f32 %v712, %v716
    %s719 = scalar_lea.vmem [#allocation2], 14
    %720 = vst.msk [vmem:[%s719] sm:$0x3] %vm152, %v718
    %v721 = vld [vmem:[%s2] sm:$0xff]
    %v722 = vld [vmem:[%s2 + $0x8] sm:$0xff]
    %v723 = vld [vmem:[%s2 + $0x10] sm:$0xff]
    %v724 = vld [vmem:[%s2 + $0x18] sm:$0xff]
    %v725 = vld [vmem:[%s3] sm:$0x1]
    %v727 = vperm.slane %v725, 0
    %v729 = vld [vmem:[#allocation2] sm:$0x3]
    %v730 = vld [vmem:[%s719] sm:$0x3]
    %732 = vrot.lane.b32.xlu0 %v730, 96
    %v733 = vpop.permute.xlu0 %732
    %738 = vrot.lane.b32.xlu0 %v721, 96
    %v739 = vpop.permute.xlu0 %738
    %740 = vrot.lane.b32.xlu0 %v722, 96
    %v741 = vpop.permute.xlu0 %740
    %742 = vrot.lane.b32.xlu0 %v723, 96
    %v743 = vpop.permute.xlu0 %742
    %744 = vrot.lane.b32.xlu0 %v724, 96
    %v745 = vpop.permute.xlu0 %744
    %vm746 = vcmask 261120
    %v747 = vsel %vm746, %v733, 0
    %v749 = vsel %vm746, %v739, 0
    %v751 = vsel %vm746, %v741, 0
    %v753 = vsel %vm746, %v743, 0
    %v755 = vsel %vm746, %v745, 0
    %757 = vmatpush.xpose.msra.mxu0 0.0
    %758 = vmatpush.xpose.msra.mxu0 0.0
    %759 = vmatpush.xpose.msra.mxu0 0.0
    %760 = vmatpush.xpose.msra.mxu0 0.0
    %761 = vmatpush.xpose.msra.mxu0 0.0
    %762 = vmatpush.xpose.msra.mxu0 0.0
    %763 = vmatpush.xpose.msra.mxu0 0.0
    %764 = vmatpush.xpose.msra.mxu0 0.0
    %765 = vmatpush.xpose.msra.mxu0 0.0
    %766 = vmatpush.xpose.msra.mxu0 0.0
    %767 = vmatpush.xpose.msra.mxu0 0.0
    %768 = vmatpush.xpose.msra.mxu0 0.0
    %769 = vmatpush.xpose.msra.mxu0 %v755
    %770 = vmatpush.xpose.msra.mxu0 %v753
    %771 = vmatpush.xpose.msra.mxu0 %v751
    %772 = vmatpush.xpose.msra.mxu0 %v749
    %773 = vmatmul.f32.gmra.mxu0 %v747
    %v774 = vpop.f32.mrf.mxu0
    %v775 = vadd.f32 0.0, %v774
    %776 = vdwg.mxu0
    %v778 = vsel %vm746, %v729, 0
    %v780 = vsel %vm746, %v721, 0
    %v782 = vsel %vm746, %v722, 0
    %v784 = vsel %vm746, %v723, 0
    %v786 = vsel %vm746, %v724, 0
    %788 = vmatpush.xpose.msra.mxu0 0.0
    %789 = vmatpush.xpose.msra.mxu0 0.0
    %790 = vmatpush.xpose.msra.mxu0 0.0
    %791 = vmatpush.xpose.msra.mxu0 0.0
    %792 = vmatpush.xpose.msra.mxu0 0.0
    %793 = vmatpush.xpose.msra.mxu0 0.0
    %794 = vmatpush.xpose.msra.mxu0 0.0
    %795 = vmatpush.xpose.msra.mxu0 0.0
    %796 = vmatpush.xpose.msra.mxu0 0.0
    %797 = vmatpush.xpose.msra.mxu0 0.0
    %798 = vmatpush.xpose.msra.mxu0 0.0
    %799 = vmatpush.xpose.msra.mxu0 0.0
    %800 = vmatpush.xpose.msra.mxu0 %v786
    %801 = vmatpush.xpose.msra.mxu0 %v784
    %802 = vmatpush.xpose.msra.mxu0 %v782
    %803 = vmatpush.xpose.msra.mxu0 %v780
    %804 = vmatmul.f32.gmra.mxu0 %v778
    %v805 = vpop.f32.mrf.mxu0
    %v806 = vadd.f32 %v775, %v805
    %807 = vdwg.mxu0
    %v808 = vadd.f32 %v806, %v727
    %v809 = vmax.f32 %v808, 0.0
    %v810 = vadd.f32 %v809, 0.0
    %v811 = vld [vmem:[%s233] sm:$0x3]
    %v812 = vld [vmem:[%s638] sm:$0x3]
    %814 = vrot.lane.b32.xlu0 %v812, 96
    %v815 = vpop.permute.xlu0 %814
    %v816 = vsel %vm746, %v815, 0
    %818 = vmatpush.xpose.msra.mxu0 0.0
    %819 = vmatpush.xpose.msra.mxu0 0.0
    %820 = vmatpush.xpose.msra.mxu0 0.0
    %821 = vmatpush.xpose.msra.mxu0 0.0
    %822 = vmatpush.xpose.msra.mxu0 0.0
    %823 = vmatpush.xpose.msra.mxu0 0.0
    %824 = vmatpush.xpose.msra.mxu0 0.0
    %825 = vmatpush.xpose.msra.mxu0 0.0
    %826 = vmatpush.xpose.msra.mxu0 0.0
    %827 = vmatpush.xpose.msra.mxu0 0.0
    %828 = vmatpush.xpose.msra.mxu0 0.0
    %829 = vmatpush.xpose.msra.mxu0 0.0
    %830 = vmatpush.xpose.msra.mxu0 %v755
    %831 = vmatpush.xpose.msra.mxu0 %v753
    %832 = vmatpush.xpose.msra.mxu0 %v751
    %833 = vmatpush.xpose.msra.mxu0 %v749
    %834 = vmatmul.f32.gmra.mxu0 %v816
    %v835 = vpop.f32.mrf.mxu0
    %v836 = vadd.f32 0.0, %v835
    %837 = vdwg.mxu0
    %v839 = vsel %vm746, %v811, 0
    %841 = vmatpush.xpose.msra.mxu0 0.0
    %842 = vmatpush.xpose.msra.mxu0 0.0
    %843 = vmatpush.xpose.msra.mxu0 0.0
    %844 = vmatpush.xpose.msra.mxu0 0.0
    %845 = vmatpush.xpose.msra.mxu0 0.0
    %846 = vmatpush.xpose.msra.mxu0 0.0
    %847 = vmatpush.xpose.msra.mxu0 0.0
    %848 = vmatpush.xpose.msra.mxu0 0.0
    %849 = vmatpush.xpose.msra.mxu0 0.0
    %850 = vmatpush.xpose.msra.mxu0 0.0
    %851 = vmatpush.xpose.msra.mxu0 0.0
    %852 = vmatpush.xpose.msra.mxu0 0.0
    %853 = vmatpush.xpose.msra.mxu0 %v786
    %854 = vmatpush.xpose.msra.mxu0 %v784
    %855 = vmatpush.xpose.msra.mxu0 %v782
    %856 = vmatpush.xpose.msra.mxu0 %v780
    %857 = vmatmul.f32.gmra.mxu0 %v839
    %v858 = vpop.f32.mrf.mxu0
    %v859 = vadd.f32 %v836, %v858
    %860 = vdwg.mxu0
    %v861 = vadd.f32 %v859, %v727
    %v862 = vmax.f32 %v861, 0.0
    %v863 = vadd.f32 %v810, %v862
    %v864 = vld [vmem:[%s314] sm:$0x3]
    %v865 = vld [vmem:[%s557] sm:$0x3]
    %867 = vrot.lane.b32.xlu0 %v865, 96
    %v868 = vpop.permute.xlu0 %867
    %v869 = vsel %vm746, %v868, 0
    %871 = vmatpush.xpose.msra.mxu0 0.0
    %872 = vmatpush.xpose.msra.mxu0 0.0
    %873 = vmatpush.xpose.msra.mxu0 0.0
    %874 = vmatpush.xpose.msra.mxu0 0.0
    %875 = vmatpush.xpose.msra.mxu0 0.0
    %876 = vmatpush.xpose.msra.mxu0 0.0
    %877 = vmatpush.xpose.msra.mxu0 0.0
    %878 = vmatpush.xpose.msra.mxu0 0.0
    %879 = vmatpush.xpose.msra.mxu0 0.0
    %880 = vmatpush.xpose.msra.mxu0 0.0
    %881 = vmatpush.xpose.msra.mxu0 0.0
    %882 = vmatpush.xpose.msra.mxu0 0.0
    %883 = vmatpush.xpose.msra.mxu0 %v755
    %884 = vmatpush.xpose.msra.mxu0 %v753
    %885 = vmatpush.xpose.msra.mxu0 %v751
    %886 = vmatpush.xpose.msra.mxu0 %v749
    %887 = vmatmul.f32.gmra.mxu0 %v869
    %v888 = vpop.f32.mrf.mxu0
    %v889 = vadd.f32 0.0, %v888
    %890 = vdwg.mxu0
    %v892 = vsel %vm746, %v864, 0
    %894 = vmatpush.xpose.msra.mxu0 0.0
    %895 = vmatpush.xpose.msra.mxu0 0.0
    %896 = vmatpush.xpose.msra.mxu0 0.0
    %897 = vmatpush.xpose.msra.mxu0 0.0
    %898 = vmatpush.xpose.msra.mxu0 0.0
    %899 = vmatpush.xpose.msra.mxu0 0.0
    %900 = vmatpush.xpose.msra.mxu0 0.0
    %901 = vmatpush.xpose.msra.mxu0 0.0
    %902 = vmatpush.xpose.msra.mxu0 0.0
    %903 = vmatpush.xpose.msra.mxu0 0.0
    %904 = vmatpush.xpose.msra.mxu0 0.0
    %905 = vmatpush.xpose.msra.mxu0 0.0
    %906 = vmatpush.xpose.msra.mxu0 %v786
    %907 = vmatpush.xpose.msra.mxu0 %v784
    %908 = vmatpush.xpose.msra.mxu0 %v782
    %909 = vmatpush.xpose.msra.mxu0 %v780
    %910 = vmatmul.f32.gmra.mxu0 %v892
    %v911 = vpop.f32.mrf.mxu0
    %v912 = vadd.f32 %v889, %v911
    %913 = vdwg.mxu0
    %v914 = vadd.f32 %v912, %v727
    %v915 = vmax.f32 %v914, 0.0
    %v916 = vadd.f32 %v863, %v915
    %v917 = vld [vmem:[%s395] sm:$0x3]
    %v918 = vld [vmem:[%s476] sm:$0x3]
    %920 = vrot.lane.b32.xlu0 %v918, 96
    %v921 = vpop.permute.xlu0 %920
    %v922 = vsel %vm746, %v921, 0
    %924 = vmatpush.xpose.msra.mxu0 0.0
    %925 = vmatpush.xpose.msra.mxu0 0.0
    %926 = vmatpush.xpose.msra.mxu0 0.0
    %927 = vmatpush.xpose.msra.mxu0 0.0
    %928 = vmatpush.xpose.msra.mxu0 0.0
    %929 = vmatpush.xpose.msra.mxu0 0.0
    %930 = vmatpush.xpose.msra.mxu0 0.0
    %931 = vmatpush.xpose.msra.mxu0 0.0
    %932 = vmatpush.xpose.msra.mxu0 0.0
    %933 = vmatpush.xpose.msra.mxu0 0.0
    %934 = vmatpush.xpose.msra.mxu0 0.0
    %935 = vmatpush.xpose.msra.mxu0 0.0
    %936 = vmatpush.xpose.msra.mxu0 %v755
    %937 = vmatpush.xpose.msra.mxu0 %v753
    %938 = vmatpush.xpose.msra.mxu0 %v751
    %939 = vmatpush.xpose.msra.mxu0 %v749
    %940 = vmatmul.f32.gmra.mxu0 %v922
    %v941 = vpop.f32.mrf.mxu0
    %v942 = vadd.f32 0.0, %v941
    %943 = vdwg.mxu0
    %v945 = vsel %vm746, %v917, 0
    %947 = vmatpush.xpose.msra.mxu0 0.0
    %948 = vmatpush.xpose.msra.mxu0 0.0
    %949 = vmatpush.xpose.msra.mxu0 0.0
    %950 = vmatpush.xpose.msra.mxu0 0.0
    %951 = vmatpush.xpose.msra.mxu0 0.0
    %952 = vmatpush.xpose.msra.mxu0 0.0
    %953 = vmatpush.xpose.msra.mxu0 0.0
    %954 = vmatpush.xpose.msra.mxu0 0.0
    %955 = vmatpush.xpose.msra.mxu0 0.0
    %956 = vmatpush.xpose.msra.mxu0 0.0
    %957 = vmatpush.xpose.msra.mxu0 0.0
    %958 = vmatpush.xpose.msra.mxu0 0.0
    %959 = vmatpush.xpose.msra.mxu0 %v786
    %960 = vmatpush.xpose.msra.mxu0 %v784
    %961 = vmatpush.xpose.msra.mxu0 %v782
    %962 = vmatpush.xpose.msra.mxu0 %v780
    %963 = vmatmul.f32.gmra.mxu0 %v945
    %v964 = vpop.f32.mrf.mxu0
    %v965 = vadd.f32 %v942, %v964
    %966 = vdwg.mxu0
    %v967 = vadd.f32 %v965, %v727
    %v968 = vmax.f32 %v967, 0.0
    %v969 = vadd.f32 %v916, %v968
    %970 = vrot.lane.b32.xlu0 %v917, 96
    %v971 = vpop.permute.xlu0 %970
    %v972 = vsel %vm746, %v971, 0
    %974 = vmatpush.xpose.msra.mxu0 0.0
    %975 = vmatpush.xpose.msra.mxu0 0.0
    %976 = vmatpush.xpose.msra.mxu0 0.0
    %977 = vmatpush.xpose.msra.mxu0 0.0
    %978 = vmatpush.xpose.msra.mxu0 0.0
    %979 = vmatpush.xpose.msra.mxu0 0.0
    %980 = vmatpush.xpose.msra.mxu0 0.0
    %981 = vmatpush.xpose.msra.mxu0 0.0
    %982 = vmatpush.xpose.msra.mxu0 0.0
    %983 = vmatpush.xpose.msra.mxu0 0.0
    %984 = vmatpush.xpose.msra.mxu0 0.0
    %985 = vmatpush.xpose.msra.mxu0 0.0
    %986 = vmatpush.xpose.msra.mxu0 %v755
    %987 = vmatpush.xpose.msra.mxu0 %v753
    %988 = vmatpush.xpose.msra.mxu0 %v751
    %989 = vmatpush.xpose.msra.mxu0 %v749
    %990 = vmatmul.f32.gmra.mxu0 %v972
    %v991 = vpop.f32.mrf.mxu0
    %v992 = vadd.f32 0.0, %v991
    %993 = vdwg.mxu0
    %v994 = vsel %vm746, %v918, 0
    %996 = vmatpush.xpose.msra.mxu0 0.0
    %997 = vmatpush.xpose.msra.mxu0 0.0
    %998 = vmatpush.xpose.msra.mxu0 0.0
    %999 = vmatpush.xpose.msra.mxu0 0.0
    %1000 = vmatpush.xpose.msra.mxu0 0.0
    %1001 = vmatpush.xpose.msra.mxu0 0.0
    %1002 = vmatpush.xpose.msra.mxu0 0.0
    %1003 = vmatpush.xpose.msra.mxu0 0.0
    %1004 = vmatpush.xpose.msra.mxu0 0.0
    %1005 = vmatpush.xpose.msra.mxu0 0.0
    %1006 = vmatpush.xpose.msra.mxu0 0.0
    %1007 = vmatpush.xpose.msra.mxu0 0.0
    %1008 = vmatpush.xpose.msra.mxu0 %v786
    %1009 = vmatpush.xpose.msra.mxu0 %v784
    %1010 = vmatpush.xpose.msra.mxu0 %v782
    %1011 = vmatpush.xpose.msra.mxu0 %v780
    %1012 = vmatmul.f32.gmra.mxu0 %v994
    %v1013 = vpop.f32.mrf.mxu0
    %v1014 = vadd.f32 %v992, %v1013
    %1015 = vdwg.mxu0
    %v1016 = vadd.f32 %v1014, %v727
    %v1017 = vmax.f32 %v1016, 0.0
    %v1018 = vadd.f32 %v969, %v1017
    %1019 = vrot.lane.b32.xlu0 %v864, 96
    %v1020 = vpop.permute.xlu0 %1019
    %v1021 = vsel %vm746, %v1020, 0
    %1023 = vmatpush.xpose.msra.mxu0 0.0
    %1024 = vmatpush.xpose.msra.mxu0 0.0
    %1025 = vmatpush.xpose.msra.mxu0 0.0
    %1026 = vmatpush.xpose.msra.mxu0 0.0
    %1027 = vmatpush.xpose.msra.mxu0 0.0
    %1028 = vmatpush.xpose.msra.mxu0 0.0
    %1029 = vmatpush.xpose.msra.mxu0 0.0
    %1030 = vmatpush.xpose.msra.mxu0 0.0
    %1031 = vmatpush.xpose.msra.mxu0 0.0
    %1032 = vmatpush.xpose.msra.mxu0 0.0
    %1033 = vmatpush.xpose.msra.mxu0 0.0
    %1034 = vmatpush.xpose.msra.mxu0 0.0
    %1035 = vmatpush.xpose.msra.mxu0 %v755
    %1036 = vmatpush.xpose.msra.mxu0 %v753
    %1037 = vmatpush.xpose.msra.mxu0 %v751
    %1038 = vmatpush.xpose.msra.mxu0 %v749
    %1039 = vmatmul.f32.gmra.mxu0 %v1021
    %v1040 = vpop.f32.mrf.mxu0
    %v1041 = vadd.f32 0.0, %v1040
    %1042 = vdwg.mxu0
    %v1043 = vsel %vm746, %v865, 0
    %1045 = vmatpush.xpose.msra.mxu0 0.0
    %1046 = vmatpush.xpose.msra.mxu0 0.0
    %1047 = vmatpush.xpose.msra.mxu0 0.0
    %1048 = vmatpush.xpose.msra.mxu0 0.0
    %1049 = vmatpush.xpose.msra.mxu0 0.0
    %1050 = vmatpush.xpose.msra.mxu0 0.0
    %1051 = vmatpush.xpose.msra.mxu0 0.0
    %1052 = vmatpush.xpose.msra.mxu0 0.0
    %1053 = vmatpush.xpose.msra.mxu0 0.0
    %1054 = vmatpush.xpose.msra.mxu0 0.0
    %1055 = vmatpush.xpose.msra.mxu0 0.0
    %1056 = vmatpush.xpose.msra.mxu0 0.0
    %1057 = vmatpush.xpose.msra.mxu0 %v786
    %1058 = vmatpush.xpose.msra.mxu0 %v784
    %1059 = vmatpush.xpose.msra.mxu0 %v782
    %1060 = vmatpush.xpose.msra.mxu0 %v780
    %1061 = vmatmul.f32.gmra.mxu0 %v1043
    %v1062 = vpop.f32.mrf.mxu0
    %v1063 = vadd.f32 %v1041, %v1062
    %1064 = vdwg.mxu0
    %v1065 = vadd.f32 %v1063, %v727
    %v1066 = vmax.f32 %v1065, 0.0
    %v1067 = vadd.f32 %v1018, %v1066
    %1068 = vrot.lane.b32.xlu0 %v811, 96
    %v1069 = vpop.permute.xlu0 %1068
    %v1070 = vsel %vm746, %v1069, 0
    %1072 = vmatpush.xpose.msra.mxu0 0.0
    %1073 = vmatpush.xpose.msra.mxu0 0.0
    %1074 = vmatpush.xpose.msra.mxu0 0.0
    %1075 = vmatpush.xpose.msra.mxu0 0.0
    %1076 = vmatpush.xpose.msra.mxu0 0.0
    %1077 = vmatpush.xpose.msra.mxu0 0.0
    %1078 = vmatpush.xpose.msra.mxu0 0.0
    %1079 = vmatpush.xpose.msra.mxu0 0.0
    %1080 = vmatpush.xpose.msra.mxu0 0.0
    %1081 = vmatpush.xpose.msra.mxu0 0.0
    %1082 = vmatpush.xpose.msra.mxu0 0.0
    %1083 = vmatpush.xpose.msra.mxu0 0.0
    %1084 = vmatpush.xpose.msra.mxu0 %v755
    %1085 = vmatpush.xpose.msra.mxu0 %v753
    %1086 = vmatpush.xpose.msra.mxu0 %v751
    %1087 = vmatpush.xpose.msra.mxu0 %v749
    %1088 = vmatmul.f32.gmra.mxu0 %v1070
    %v1089 = vpop.f32.mrf.mxu0
    %v1090 = vadd.f32 0.0, %v1089
    %1091 = vdwg.mxu0
    %v1092 = vsel %vm746, %v812, 0
    %1094 = vmatpush.xpose.msra.mxu0 0.0
    %1095 = vmatpush.xpose.msra.mxu0 0.0
    %1096 = vmatpush.xpose.msra.mxu0 0.0
    %1097 = vmatpush.xpose.msra.mxu0 0.0
    %1098 = vmatpush.xpose.msra.mxu0 0.0
    %1099 = vmatpush.xpose.msra.mxu0 0.0
    %1100 = vmatpush.xpose.msra.mxu0 0.0
    %1101 = vmatpush.xpose.msra.mxu0 0.0
    %1102 = vmatpush.xpose.msra.mxu0 0.0
    %1103 = vmatpush.xpose.msra.mxu0 0.0
    %1104 = vmatpush.xpose.msra.mxu0 0.0
    %1105 = vmatpush.xpose.msra.mxu0 0.0
    %1106 = vmatpush.xpose.msra.mxu0 %v786
    %1107 = vmatpush.xpose.msra.mxu0 %v784
    %1108 = vmatpush.xpose.msra.mxu0 %v782
    %1109 = vmatpush.xpose.msra.mxu0 %v780
    %1110 = vmatmul.f32.gmra.mxu0 %v1092
    %v1111 = vpop.f32.mrf.mxu0
    %v1112 = vadd.f32 %v1090, %v1111
    %1113 = vdwg.mxu0
    %v1114 = vadd.f32 %v1112, %v727
    %v1115 = vmax.f32 %v1114, 0.0
    %v1116 = vadd.f32 %v1067, %v1115
    %1117 = vrot.lane.b32.xlu0 %v729, 96
    %v1118 = vpop.permute.xlu0 %1117
    %v1119 = vsel %vm746, %v1118, 0
    %1121 = vmatpush.xpose.msra.mxu0 0.0
    %1122 = vmatpush.xpose.msra.mxu0 0.0
    %1123 = vmatpush.xpose.msra.mxu0 0.0
    %1124 = vmatpush.xpose.msra.mxu0 0.0
    %1125 = vmatpush.xpose.msra.mxu0 0.0
    %1126 = vmatpush.xpose.msra.mxu0 0.0
    %1127 = vmatpush.xpose.msra.mxu0 0.0
    %1128 = vmatpush.xpose.msra.mxu0 0.0
    %1129 = vmatpush.xpose.msra.mxu0 0.0
    %1130 = vmatpush.xpose.msra.mxu0 0.0
    %1131 = vmatpush.xpose.msra.mxu0 0.0
    %1132 = vmatpush.xpose.msra.mxu0 0.0
    %1133 = vmatpush.xpose.msra.mxu0 %v755
    %1134 = vmatpush.xpose.msra.mxu0 %v753
    %1135 = vmatpush.xpose.msra.mxu0 %v751
    %1136 = vmatpush.xpose.msra.mxu0 %v749
    %1137 = vmatmul.f32.gmra.mxu0 %v1119
    %v1138 = vpop.f32.mrf.mxu0
    %v1139 = vadd.f32 0.0, %v1138
    %1140 = vdwg.mxu0
    %v1141 = vsel %vm746, %v730, 0
    %1143 = vmatpush.xpose.msra.mxu0 0.0
    %1144 = vmatpush.xpose.msra.mxu0 0.0
    %1145 = vmatpush.xpose.msra.mxu0 0.0
    %1146 = vmatpush.xpose.msra.mxu0 0.0
    %1147 = vmatpush.xpose.msra.mxu0 0.0
    %1148 = vmatpush.xpose.msra.mxu0 0.0
    %1149 = vmatpush.xpose.msra.mxu0 0.0
    %1150 = vmatpush.xpose.msra.mxu0 0.0
    %1151 = vmatpush.xpose.msra.mxu0 0.0
    %1152 = vmatpush.xpose.msra.mxu0 0.0
    %1153 = vmatpush.xpose.msra.mxu0 0.0
    %1154 = vmatpush.xpose.msra.mxu0 0.0
    %1155 = vmatpush.xpose.msra.mxu0 %v786
    %1156 = vmatpush.xpose.msra.mxu0 %v784
    %1157 = vmatpush.xpose.msra.mxu0 %v782
    %1158 = vmatpush.xpose.msra.mxu0 %v780
    %1159 = vmatmul.f32.gmra.mxu0 %v1141
    %v1160 = vpop.f32.mrf.mxu0
    %v1161 = vadd.f32 %v1139, %v1160
    %1162 = vdwg.mxu0
    %v1163 = vadd.f32 %v1161, %v727
    %v1164 = vmax.f32 %v1163, 0.0
    %v1165 = vadd.f32 %v1116, %v1164
    %v1166 = vmul.f32 %v1165, 0.125
    %v1167 = vld [vmem:[%s4] sm:$0x3]
    %v1168 = vld [vmem:[%s5] sm:$0x1]
    %v1170 = vperm.slane %v1168, 0
    %v1173 = vsel %vm746, %v1166, 0
    %v1176 = vsel %vm746, %v1167, 0
    %1178 = vmatpush.xpose.msra.mxu0 0.0
    %1179 = vmatpush.xpose.msra.mxu0 0.0
    %1180 = vmatpush.xpose.msra.mxu0 0.0
    %1181 = vmatpush.xpose.msra.mxu0 0.0
    %1182 = vmatpush.xpose.msra.mxu0 0.0
    %1183 = vmatpush.xpose.msra.mxu0 0.0
    %1184 = vmatpush.xpose.msra.mxu0 0.0
    %1185 = vmatpush.xpose.msra.mxu0 0.0
    %1186 = vmatpush.xpose.msra.mxu0 0.0
    %1187 = vmatpush.xpose.msra.mxu0 0.0
    %1188 = vmatpush.xpose.msra.mxu0 0.0
    %1189 = vmatpush.xpose.msra.mxu0 0.0
    %1190 = vmatpush.xpose.msra.mxu0 0.0
    %1191 = vmatpush.xpose.msra.mxu0 0.0
    %1192 = vmatpush.xpose.msra.mxu0 0.0
    %1193 = vmatpush.xpose.msra.mxu0 %v1176
    %1194 = vmatmul.f32.gmra.mxu0 %v1173
    %v1195 = vpop.f32.mrf.mxu0
    %v1196 = vadd.f32 %v1170, %v1195
    %1197 = vdwg.mxu0
    %vm1198 = vcmask 9216
    %v1199 = vsel %vm1198, %v1196, -inf
    %1200 = vmax.xlane.f32.xlu0 %v1199
    %v1201 = vpop.xlane.xlu0 %1200
    %v1202 = vsub.f32 %v1196, %v1201
    %v1203 = vmul.f32 %v1202, 1.442695
    %v1204 = vpow.pop %v1203
    %v1205 = vsel %vm1198, %v1204, 0.0
    %1206 = vadd.xlane.f32.xlu0 %v1205
    %v1207 = vpop.xlane.xlu0 %1206
    %v1208 = vrcp.pop %v1207
    %v1209 = vmul.f32 %v1207, %v1208
    %v1210 = vsub.f32 1.0, %v1209
    %v1211 = vmul.f32 %v1208, %v1210
    %v1212 = vadd.f32 %v1208, %v1211
    %vm1213 = vweird.f32 %v1207
    %vm1214 = vweird.f32 %v1208
    %vm1215 = vmor %vm1213, %vm1214
    %v1216 = vsel %vm1215, %v1208, %v1212
    %v1217 = vand.u32 2147483647, %v1207
    %vm1218 = vcmp.eq.f32.partialorder %v1217, 8.507059e+37
    %v1219 = vand.u32 %v1207, 2147483648
    %v1220 = vor.u32 1.1754944e-38, %v1219
    %v1221 = vsel %vm1218, %v1220, %v1216
    %v1222 = vmul.f32 %v1204, %v1221
    %1223 = vst.msk [vmem:[#allocation3] sm:$0x3] %vm1198, %v1222
    // Predicated region
    $region26: #{sentence_match_forward.1} parent=1 // pred_check
      _
    $region27: #{sentence_match_forward.1} parent=1 // pred_check_branch
      %1225 = sbr.rel (0) target = $region29
    $region28: #{sentence_match_forward.1} parent=1 // pred_region
      %1227 = vsyncadd [#allocation4], 0
      %s1229 = sshll.u32 [#allocation3], 4
      %s1230 = int_to_ptr.vmem [resolvable:$true] %s1229
      %s1231 = sshll.u32 %s6, 4
      %s1232 = int_to_ptr.hbm [resolvable:$true] %s1231
      %1234 = dma.vmem_to_hbm [thread:$0]  %s1230, 32, %s1232, [#allocation4]
    $region29: #{sentence_match_forward.1} parent=1 // pred_fallthru
      _
    // Predicated region
    $region30: #{sentence_match_forward.1} parent=1 // pred_check
      _
    $region31: #{sentence_match_forward.1} parent=1 // pred_check_branch
      %1236 = sbr.rel (0) target = $region33
    $region32: #{sentence_match_forward.1} parent=1 // pred_region
      %1238 = dma.done [#allocation4], 32
    $region33: #{sentence_match_forward.1} parent=1 // pred_fallthru
      _
    %1239 = vsyncpa [#allocation4], 1

</llo_original>
